<compile_context>
chip_gen: v7x
topology: tpu7x:2x2x1
jax: 0.10.0
libtpu: 0.0.40
codegen_flags: <defaults>
</compile_context>

<pallas_src>
import functools

import jax
import jax.numpy as jnp
from jax import lax
from jax.experimental import pallas as pl
from jax.experimental.pallas import tpu as pltpu

H = 128                 # hidden_size
D = 128 * 18 * 2        # LSTM input size = 4608
NUM_GATES = 4           # PyTorch gate order: i, f, g, o
G = NUM_GATES * H       # 512


# ---------------------------------------------------------------------------
# Stage 1: hoisted input projection  xp = x_flat @ W_ih1^T + b1
# ---------------------------------------------------------------------------
def _proj_kernel(x_ref, w_ref, b_ref, o_ref, acc_ref):
    k = pl.program_id(1)

    @pl.when(k == 0)
    def _():
        acc_ref[...] = jnp.zeros_like(acc_ref)

    acc_ref[...] += jnp.dot(x_ref[...], w_ref[...],
                            preferred_element_type=jnp.float32)

    @pl.when(k == pl.num_programs(1) - 1)
    def _():
        o_ref[...] = (acc_ref[...] + b_ref[...]).astype(o_ref.dtype)


def _input_projection(x_flat, w_t, b, *, tm=256, tk=512):
    """x_flat: (M, D) f32; w_t: (D, 4H); b: (1, 4H)  ->  (M, 4H)."""
    M, K = x_flat.shape
    N = w_t.shape[1]
    tm = min(tm, M)
    assert K % tk == 0, (K, tk)

    return pl.pallas_call(
        _proj_kernel,
        out_shape=jax.ShapeDtypeStruct((M, N), x_flat.dtype),
        grid_spec=pltpu.PrefetchScalarGridSpec(
            num_scalar_prefetch=0,
            grid=(pl.cdiv(M, tm), K // tk),
            in_specs=[
                pl.BlockSpec((tm, tk), lambda m, k: (m, k)),   # x tile
                pl.BlockSpec((tk, N), lambda m, k: (k, 0)),    # W_ih1^T tile
                pl.BlockSpec((1, N), lambda m, k: (0, 0)),     # bias
            ],
            out_specs=pl.BlockSpec((tm, N), lambda m, k: (m, 0)),
            scratch_shapes=[pltpu.VMEM((tm, N), jnp.float32)],
        ),
        compiler_params=pltpu.CompilerParams(
            dimension_semantics=("parallel", "arbitrary"),
            vmem_limit_bytes=32 << 20,
        ),
    )(x_flat, w_t, b)


# ---------------------------------------------------------------------------
# Stage 2: recurrent kernel (both LSTM layers, T_CHUNK steps per grid step)
# ---------------------------------------------------------------------------
def _recurrent_kernel(xp_ref, whh1_ref, w2_ref, b2_ref, out_ref,
                      h1_ref, c1_ref, h2_ref, c2_ref, *, t_chunk, b_pad):
    chunk = pl.program_id(0)

    @pl.when(chunk == 0)
    def _():
        h1_ref[...] = jnp.zeros_like(h1_ref)
        c1_ref[...] = jnp.zeros_like(c1_ref)
        h2_ref[...] = jnp.zeros_like(h2_ref)
        c2_ref[...] = jnp.zeros_like(c2_ref)

    # Hoist weight loads / bias broadcast out of the inner timestep loop
    # (JAX does not CSE broadcast_in_dim inside loops).
    whh1 = whh1_ref[...]                                   # (H, 4H)
    w2 = w2_ref[...]                                       # (2H, 4H)
    b2b = jnp.broadcast_to(b2_ref[...], (b_pad, G))        # (B, 4H)

    def step(i, carry):
        h1, c1, h2, c2 = carry

        # ---- layer 1: input projection was precomputed; recurrent term only
        g1 = xp_ref[i] + jnp.dot(h1, whh1, preferred_element_type=jnp.float32)
        i1 = jax.nn.sigmoid(g1[:, 0 * H:1 * H])
        f1 = jax.nn.sigmoid(g1[:, 1 * H:2 * H])
        n1 = jnp.tanh(g1[:, 2 * H:3 * H])
        o1 = jax.nn.sigmoid(g1[:, 3 * H:4 * H])
        c1 = f1 * c1 + i1 * n1
        h1 = o1 * jnp.tanh(c1)

        # ---- layer 2: fused [h1, h2] @ [W_ih2^T ; W_hh2^T]  (single K=256 dot)
        g2 = jnp.dot(jnp.concatenate([h1, h2], axis=-1), w2,
                     preferred_element_type=jnp.float32) + b2b
        i2 = jax.nn.sigmoid(g2[:, 0 * H:1 * H])
        f2 = jax.nn.sigmoid(g2[:, 1 * H:2 * H])
        n2 = jnp.tanh(g2[:, 2 * H:3 * H])
        o2 = jax.nn.sigmoid(g2[:, 3 * H:4 * H])
        c2 = f2 * c2 + i2 * n2
        h2 = o2 * jnp.tanh(c2)

        out_ref[i] = h2.astype(out_ref.dtype)
        return (h1, c1, h2, c2)

    carry0 = (h1_ref[...], c1_ref[...], h2_ref[...], c2_ref[...])
    h1f, c1f, h2f, c2f = lax.fori_loop(0, t_chunk, step, carry0, unroll=True)
    h1_ref[...] = h1f
    c1_ref[...] = c1f
    h2_ref[...] = h2f
    c2_ref[...] = c2f


def my_encode_lstm(x, params, *, t_chunk=8):
    """x: (B, T, D) float32 -> out: (B, T, H) float32 (PyTorch LSTM `out`)."""
    wih1_t, whh1_t, b1, wih2_t, whh2_t, b2 = params
    B, T, _ = x.shape

    b_pad = ((B + 7) // 8) * 8                 # pad batch to full sublanes
    t_pad = pl.cdiv(T, t_chunk) * t_chunk      # pad time to chunk multiple

    # time-major + pad (padded time steps come AFTER real ones, so they cannot
    # corrupt real outputs; padded batch rows are sliced off at the end).
    x_tm = jnp.transpose(x, (1, 0, 2))                                   # (T,B,D)
    x_tm = jnp.pad(x_tm, ((0, t_pad - T), (0, b_pad - B), (0, 0)))

    # Stage 1: one big GEMM for the whole sequence.
    xp = _input_projection(x_tm.reshape(t_pad * b_pad, D), wih1_t, b1)
    xp = xp.reshape(t_pad, b_pad, G)

    # Pre-concatenate layer-2 weights: [W_ih2^T ; W_hh2^T] -> (2H, 4H).
    w2cat = jnp.concatenate([wih2_t, whh2_t], axis=0)

    # Stage 2: recurrent kernel.
    kernel = functools.partial(_recurrent_kernel, t_chunk=t_chunk, b_pad=b_pad)
    out_tm = pl.pallas_call(
        kernel,
        out_shape=jax.ShapeDtypeStruct((t_pad, b_pad, H), x.dtype),
        grid_spec=pltpu.PrefetchScalarGridSpec(
            num_scalar_prefetch=0,
            grid=(t_pad // t_chunk,),
            in_specs=[
                pl.BlockSpec((t_chunk, b_pad, G), lambda c: (c, 0, 0)),  # xp chunk
                pl.BlockSpec((H, G), lambda c: (0, 0)),                  # W_hh1^T
                pl.BlockSpec((2 * H, G), lambda c: (0, 0)),              # [Wih2;Whh2]^T
                pl.BlockSpec((1, G), lambda c: (0, 0)),                  # b2
            ],
            out_specs=pl.BlockSpec((t_chunk, b_pad, H), lambda c: (c, 0, 0)),
            scratch_shapes=[pltpu.VMEM((b_pad, H), jnp.float32)] * 4,    # h1,c1,h2,c2
        ),
        compiler_params=pltpu.CompilerParams(
            dimension_semantics=("arbitrary",),   # sequential recurrence
            vmem_limit_bytes=32 << 20,            # tight; fits v5e/v6e/v7x
        ),
    )(xp, whh1_t, w2cat, b2)

    return jnp.transpose(out_tm, (1, 0, 2))[:B, :T]   # back to batch-first


# ---------------- pure-JAX reference (for correctness check) ----------------
def _lstm_layer_ref(xs, wih_t, whh_t, b):
    B = xs.shape[0]
    hp = jax.lax.Precision.HIGHEST

    def step(carry, xt):
        h, c = carry
        g = (jnp.dot(xt, wih_t, precision=hp)
             + jnp.dot(h, whh_t, precision=hp) + b)
        i = jax.nn.sigmoid(g[:, 0 * H:1 * H])
        f = jax.nn.sigmoid(g[:, 1 * H:2 * H])
        n = jnp.tanh(g[:, 2 * H:3 * H])
        o = jax.nn.sigmoid(g[:, 3 * H:4 * H])
        c = f * c + i * n
        h = o * jnp.tanh(c)
        return (h, c), h

    init = (jnp.zeros((B, H), jnp.float32), jnp.zeros((B, H), jnp.float32))
    _, hs = jax.lax.scan(step, init, jnp.transpose(xs, (1, 0, 2)))
    return jnp.transpose(hs, (1, 0, 2))


def my_encode_lstm_ref(x, params):
    wih1_t, whh1_t, b1, wih2_t, whh2_t, b2 = params
    y1 = _lstm_layer_ref(x, wih1_t, whh1_t, b1)
    return _lstm_layer_ref(y1, wih2_t, whh2_t, b2)


def init_params(key):
    """PyTorch nn.LSTM default init: U(-k, k), k = 1/sqrt(hidden_size)."""
    k = 1.0 / jnp.sqrt(jnp.float32(H))
    keys = jax.random.split(key, 8)

    def u(kk, shape):
        return jax.random.uniform(kk, shape, jnp.float32, -k, k)

    # layer 0
    w_ih0 = u(keys[0], (NUM_GATES * H, D))
    w_hh0 = u(keys[1], (NUM_GATES * H, H))
    b_ih0 = u(keys[2], (NUM_GATES * H,))
    b_hh0 = u(keys[3], (NUM_GATES * H,))
    # layer 1
    w_ih1 = u(keys[4], (NUM_GATES * H, H))
    w_hh1 = u(keys[5], (NUM_GATES * H, H))
    b_ih1 = u(keys[6], (NUM_GATES * H,))
    b_hh1 = u(keys[7], (NUM_GATES * H,))

    return (
        w_ih0.T, w_hh0.T, (b_ih0 + b_hh0).reshape(1, NUM_GATES * H),
        w_ih1.T, w_hh1.T, (b_ih1 + b_hh1).reshape(1, NUM_GATES * H),
    )


if __name__ == "__main__":
    B, T = 2, 8  # small batch / sequence length; feature dim fixed by the module
    key = jax.random.PRNGKey(0)
    kx, kp = jax.random.split(key)

    x = jax.random.normal(kx, (B, T, D), jnp.float32)
    params = init_params(kp)

    out = jax.block_until_ready(my_encode_lstm(x, params))
    assert out.shape == (B, T, H), out.shape

    ref = jax.block_until_ready(my_encode_lstm_ref(x, params))
    assert jnp.allclose(out, ref, atol=2e-3, rtol=2e-3), (
        float(jnp.max(jnp.abs(out - ref))))

    print("KERNEL_OK")
</pallas_src>

<mosaic_0001>
module attributes {stable_mosaic.version = 11 : i64} {
  func.func @_proj_kernel(%arg0: i32, %arg1: i32, %arg2: memref<64x512xf32, #tpu.memory_space<vmem>>, %arg3: memref<512x512xf32, #tpu.memory_space<vmem>>, %arg4: memref<1x512xf32, #tpu.memory_space<vmem>>, %arg5: memref<64x512xf32, #tpu.memory_space<vmem>>, %arg6: memref<64x512xf32, #tpu.memory_space<vmem>>) attributes {dimension_semantics = [#tpu.dimension_semantics<parallel>, #tpu.dimension_semantics<arbitrary>], iteration_bounds = array<i64: 1, 9>, scalar_prefetch = 0 : i64, scratch_operands = 1 : i64, tpu.core_type = #tpu.core_type<tc>, window_params = [{transform_indices = @transform_0, window_bounds = array<i64: 64, 512>}, {transform_indices = @transform_1, window_bounds = array<i64: 512, 512>}, {pipeline_mode = #tpu.pipeline_mode<synchronous>, transform_indices = @transform_2, window_bounds = array<i64: 1, 512>}, {transform_indices = @transform_3, window_bounds = array<i64: 64, 512>}]} {
    %c0_i32 = arith.constant 0 : i32
    %0 = arith.cmpi eq, %arg1, %c0_i32 : i32
    %1 = arith.extui %0 : i1 to i32
    %c0_i32_0 = arith.constant 0 : i32
    %2 = arith.cmpi ne, %1, %c0_i32_0 : i32
    scf.if %2 {
      %cst_9 = arith.constant 0.000000e+00 : f32
      %12 = vector.broadcast %cst_9 : f32 to vector<64x512xf32>
      %c0_10 = arith.constant 0 : index
      %c0_11 = arith.constant 0 : index
      %13 = vector.load %arg6[%c0_10, %c0_11] : memref<64x512xf32, #tpu.memory_space<vmem>>, vector<64x512xf32>
      tpu.vector_store %arg6[%c0_10, %c0_11], %12 {strides = array<i32>} : memref<64x512xf32, #tpu.memory_space<vmem>>, vector<64x512xf32>,
    } else {
    }
    %c0 = arith.constant 0 : index
    %c0_1 = arith.constant 0 : index
    %3 = vector.load %arg6[%c0, %c0_1] : memref<64x512xf32, #tpu.memory_space<vmem>>, vector<64x512xf32>
    %c0_2 = arith.constant 0 : index
    %c0_3 = arith.constant 0 : index
    %4 = vector.load %arg2[%c0_2, %c0_3] : memref<64x512xf32, #tpu.memory_space<vmem>>, vector<64x512xf32>
    %c0_4 = arith.constant 0 : index
    %c0_5 = arith.constant 0 : index
    %5 = vector.load %arg3[%c0_4, %c0_5] : memref<512x512xf32, #tpu.memory_space<vmem>>, vector<512x512xf32>
    %cst = arith.constant dense<0.000000e+00> : vector<64x512xf32>
    %6 = tpu.matmul %4, %5, %cst {dimension_numbers = #tpu.dot_dimension_numbers<[1], [0], [0], [1], [0, 0, 1, 1], [], []>} : vector<64x512xf32>, vector<512x512xf32>, vector<64x512xf32> -> vector<64x512xf32>
    %7 = arith.addf %3, %6 : vector<64x512xf32>
    %c0_6 = arith.constant 0 : index
    %c0_7 = arith.constant 0 : index
    %8 = vector.load %arg6[%c0_6, %c0_7] : memref<64x512xf32, #tpu.memory_space<vmem>>, vector<64x512xf32>
    tpu.vector_store %arg6[%c0_6, %c0_7], %7 {strides = array<i32>} : memref<64x512xf32, #tpu.memory_space<vmem>>, vector<64x512xf32>,
    %c8_i32 = arith.constant 8 : i32
    %9 = arith.cmpi eq, %arg1, %c8_i32 : i32
    %10 = arith.extui %9 : i1 to i32
    %c0_i32_8 = arith.constant 0 : i32
    %11 = arith.cmpi ne, %10, %c0_i32_8 : i32
    scf.if %11 {
      %c0_9 = arith.constant 0 : index
      %c0_10 = arith.constant 0 : index
      %12 = vector.load %arg6[%c0_9, %c0_10] : memref<64x512xf32, #tpu.memory_space<vmem>>, vector<64x512xf32>
      %c0_11 = arith.constant 0 : index
      %c0_12 = arith.constant 0 : index
      %13 = vector.load %arg4[%c0_11, %c0_12] : memref<1x512xf32, #tpu.memory_space<vmem>>, vector<1x512xf32>
      %14 = vector.broadcast %13 : vector<1x512xf32> to vector<64x512xf32>
      %15 = arith.addf %12, %14 : vector<64x512xf32>
      %c0_13 = arith.constant 0 : index
      %c0_14 = arith.constant 0 : index
      %16 = vector.load %arg5[%c0_13, %c0_14] : memref<64x512xf32, #tpu.memory_space<vmem>>, vector<64x512xf32>
      tpu.vector_store %arg5[%c0_13, %c0_14], %15 {strides = array<i32>} : memref<64x512xf32, #tpu.memory_space<vmem>>, vector<64x512xf32>,
    } else {
    }
    return
  }
  func.func @transform_0(%arg0: i32, %arg1: i32) -> (i32, i32) {
    %c0_i32 = arith.constant 0 : i32
    return %arg0, %arg1 : i32, i32
  }
  func.func @transform_1(%arg0: i32, %arg1: i32) -> (i32, i32) {
    %c0_i32 = arith.constant 0 : i32
    %c0_i32_0 = arith.constant 0 : i32
    return %arg1, %c0_i32 : i32, i32
  }
  func.func @transform_2(%arg0: i32, %arg1: i32) -> (i32, i32) {
    %c0_i32 = arith.constant 0 : i32
    %c0_i32_0 = arith.constant 0 : i32
    %c0_i32_1 = arith.constant 0 : i32
    return %c0_i32, %c0_i32_0 : i32, i32
  }
  func.func @transform_3(%arg0: i32, %arg1: i32) -> (i32, i32) {
    %c0_i32 = arith.constant 0 : i32
    %c0_i32_0 = arith.constant 0 : i32
    return %arg0, %c0_i32 : i32, i32
  }
}

</mosaic_0001>

<llo_original>
// kernel: tpu_custom_call.1
$region0: #{tpu_custom_call.1}
  #allocation0 [shape = 'u32[]', space=smem, size = 0x4, offset = 0x4, fixed_abs, tag = 'smem constant byte address 0x4 - core index']
  #allocation1 [shape = 'u32[144,128]{1,0:T(1,128)}', space=vmem, size = 0x12000, scoped, tag = 'internal scratch']
  #allocation2 [shape = 'f32[64,512]{1,0:T(8,128)}', space=vmem, size = 0x20000, scoped, tag = 'scratch operand']
  %s0 = inlined_call_operand.hbm [shape: f32[64,4608], index: 0, kind: input, shape index: {}]
  %s1 = inlined_call_operand.hbm [shape: f32[4608,512], index: 1, kind: input, shape index: {}]
  %s2 = inlined_call_operand.hbm [shape: f32[1,512], index: 2, kind: input, shape index: {}]
  %s3 = inlined_call_operand.hbm [shape: f32[64,512], index: 3, kind: output, shape index: {}]
  %s4 = sld [smem:[#allocation0]]
  $region65: #{tpu_custom_call.1} parent=0
    _
  %s6 = ssub.s32 1, %s4
  %s7 = scalar_select 0, %s6, %s4
  $region1: #{tpu_custom_call.1} parent=0
    #allocation3 [shape = 'u8[262144]{0}', space=vmem, size = 0x40000, scoped, tag = 'input window, operand 0']
    #allocation4 [shape = 's32[2]{0}', space=sflag, size = 0x8, scoped, tag = 'scoped memory for tpu_custom_call.1']
    #allocation5 [shape = 's32[2]{0}', space=sflag, size = 0x8, scoped, tag = 'scoped memory for tpu_custom_call.1']
    #allocation6 [shape = 'u8[2097152]{0}', space=vmem, size = 0x200000, scoped, tag = 'input window, operand 1']
    #allocation7 [shape = 's32[2]{0}', space=sflag, size = 0x8, scoped, tag = 'scoped memory for tpu_custom_call.1']
    #allocation8 [shape = 'u8[2048]{0}', space=vmem, size = 0x800, scoped, tag = 'input window, operand 2, single buffered']
    #allocation9 [shape = 'u8[131072]{0}', space=vmem, size = 0x20000, scoped, tag = 'output window, operand 0, single buffered']
    %8 = vsyncpa [#allocation4], 0
    %s9 = scalar_lea.sflag [#allocation4], 1
    %10 = vsyncpa %s9, 0
    %11 = vsyncpa [#allocation7], 0
    %s12 = scalar_lea.sflag [#allocation7], 1
    %13 = vsyncpa %s12, 0
    %14 = vsyncpa [#allocation5], 0
    loop: start=0, step=1, limit=11
    $region2: #{tpu_custom_call.1} parent=1 // loop_pre_header
      _
    $region3: #{tpu_custom_call.1} parent=1 // loop_header
      %s16 = sphi 0, %s20
      %p17 = scmp.ge.s32.totalorder %s16, 11
      %s23 = sphi 0, %s35
      %s24 = sphi 0, %s31
      %s25 = sphi 0, %s23
      %s26 = sphi 0, %s24
      %s27 = sphi 0, %s25
      %s28 = sphi 0, %s26
      %s40 = sphi 0, %s42
      %s43 = sphi 0, %s40
      %s44 = sphi 0, %s43
      %s60 = sphi 0, %s44
      %s66 = sphi 0, %s68
      %s69 = sphi 0, %s66
      %s70 = sphi 0, %s69
      %s86 = sphi 0, %s70
      %s90 = sphi 0, %s90
      %s92 = sphi 0, %s90
      %s93 = sphi 0, %s92
      %s107 = sphi 0, %s93
      %s113 = sphi 0, %s115
      %s116 = sphi 0, %s113
      %s117 = sphi 0, %s116
      %s133 = sphi 0, %s117
    $region4: #{tpu_custom_call.1} parent=1 // loop_header_branch
      %19 = sbr.rel (%p17) target = $region8
    $region5: #{tpu_custom_call.1} parent=1 // loop_body
      %s21 = ssub.s32 %s16, 1
      %s22 = ssub.s32 %s16, 2
      %s29 = sadd.s32 1, %s24
      %p30 = scmp.ge.s32.totalorder %s29, 9
      %s31 = scalar_select %p30, 0, %s29
      %s32 = sadd.s32 1, %s23
      %s33 = scalar_select %p30, %s32, %s23
      %p34 = scmp.ge.s32.totalorder %s33, 1
      %s35 = scalar_select %p34, 0, %s33
      %s36 = ssub.s32 %s23, %s35
      %s37 = ssub.s32 %s24, %s31
      %s38 = sor.u32 %s36, %s37
      %p39 = scmp.eq.s32.totalorder %s38, 0
      %s41 = sadd.s32 %s40, 1
      %s42 = scalar_select %p39, %s40, %s41
      %p45 = pneg %p39
      %p46 = scmp.eq.s32.totalorder %s16, 8
      %p47 = por %p45, %p46
      %p48 = scmp.ne.s32.totalorder %s40, %s43
      %p49 = scmp.eq.s32.totalorder %s16, 0
      %p50 = por %p48, %p49
      %p51 = scmp.ne.s32.totalorder %s40, %s43
      %p52 = scmp.eq.s32.totalorder %s21, 8
      %p53 = por %p51, %p52
      %p54 = scmp.ne.s32.totalorder %s43, %s44
      %p55 = scmp.eq.s32.totalorder %s21, 0
      %p56 = por %p54, %p55
      %p57 = scmp.ne.s32.totalorder %s43, %s44
      %p58 = scmp.eq.s32.totalorder %s22, 8
      %p59 = por %p57, %p58
      %p61 = scmp.ne.s32.totalorder %s44, %s60
      %p62 = scmp.eq.s32.totalorder %s22, 0
      %p63 = por %p61, %p62
      %s64 = ssub.s32 %s24, %s31
      %p65 = scmp.eq.s32.totalorder %s64, 0
      %s67 = sadd.s32 %s66, 1
      %s68 = scalar_select %p65, %s66, %s67
      %p71 = pneg %p65
      %p72 = scmp.eq.s32.totalorder %s16, 8
      %p73 = por %p71, %p72
      %p74 = scmp.ne.s32.totalorder %s66, %s69
      %p75 = scmp.eq.s32.totalorder %s16, 0
      %p76 = por %p74, %p75
      %p77 = scmp.ne.s32.totalorder %s66, %s69
      %p78 = scmp.eq.s32.totalorder %s21, 8
      %p79 = por %p77, %p78
      %p80 = scmp.ne.s32.totalorder %s69, %s70
      %p81 = scmp.eq.s32.totalorder %s21, 0
      %p82 = por %p80, %p81
      %p83 = scmp.ne.s32.totalorder %s69, %s70
      %p84 = scmp.eq.s32.totalorder %s22, 8
      %p85 = por %p83, %p84
      %p87 = scmp.ne.s32.totalorder %s70, %s86
      %p88 = scmp.eq.s32.totalorder %s22, 0
      %p89 = por %p87, %p88
      %s91 = sadd.s32 %s90, 1
      %p94 = scmp.eq.s32.totalorder %s16, 8
      %p95 = scmp.ne.s32.totalorder %s90, %s92
      %p96 = scmp.eq.s32.totalorder %s16, 0
      %p97 = por %p95, %p96
      %p98 = scmp.ne.s32.totalorder %s90, %s92
      %p99 = scmp.eq.s32.totalorder %s21, 8
      %p100 = por %p98, %p99
      %p101 = scmp.ne.s32.totalorder %s92, %s93
      %p102 = scmp.eq.s32.totalorder %s21, 0
      %p103 = por %p101, %p102
      %p104 = scmp.ne.s32.totalorder %s92, %s93
      %p105 = scmp.eq.s32.totalorder %s22, 8
      %p106 = por %p104, %p105
      %p108 = scmp.ne.s32.totalorder %s93, %s107
      %p109 = scmp.eq.s32.totalorder %s22, 0
      %p110 = por %p108, %p109
      %s111 = ssub.s32 %s23, %s35
      %p112 = scmp.eq.s32.totalorder %s111, 0
      %s114 = sadd.s32 %s113, 1
      %s115 = scalar_select %p112, %s113, %s114
      %p118 = pneg %p112
      %p119 = scmp.eq.s32.totalorder %s16, 8
      %p120 = por %p118, %p119
      %p121 = scmp.ne.s32.totalorder %s113, %s116
      %p122 = scmp.eq.s32.totalorder %s16, 0
      %p123 = por %p121, %p122
      %p124 = scmp.ne.s32.totalorder %s113, %s116
      %p125 = scmp.eq.s32.totalorder %s21, 8
      %p126 = por %p124, %p125
      %p127 = scmp.ne.s32.totalorder %s116, %s117
      %p128 = scmp.eq.s32.totalorder %s21, 0
      %p129 = por %p127, %p128
      %p130 = scmp.ne.s32.totalorder %s116, %s117
      %p131 = scmp.eq.s32.totalorder %s22, 8
      %p132 = por %p130, %p131
      %p134 = scmp.ne.s32.totalorder %s117, %s133
      %p135 = scmp.eq.s32.totalorder %s22, 0
      %p136 = por %p134, %p135
      %p137 = scmp.le.s32.totalorder 1, %s16
      %p138 = scmp.lt.s32.totalorder %s16, 10
      %p139 = pnand %p137, %p138
      %p140 = pneg %p139
      // Predicated region
      $region9: #{tpu_custom_call.1} parent=5 // pred_check
        _
      $region10: #{tpu_custom_call.1} parent=5 // pred_check_branch
        %142 = sbr.rel (%p139) target = $region12
      $region11: #{tpu_custom_call.1} parent=5 // pred_region
        %s143 = ssub.s32 %s16, 1
        // Predicated region
        $region13: #{tpu_custom_call.1} parent=11 // pred_check
          %p144 = pneg %p103
        $region14: #{tpu_custom_call.1} parent=11 // pred_check_branch
          %146 = sbr.rel (%p144) target = $region16
        $region15: #{tpu_custom_call.1} parent=11 // pred_region
          %s148 = ssub.s32 64, 64
          %149 = vsyncadd [#allocation7], %s148
          %s151 = sshll.u32 [#allocation8], 4
          %s152 = int_to_ptr.vmem [resolvable:$true] %s151
          %154 = dma.hbm_to_vmem [thread:$0]  %s2, 64, %s152, [#allocation7]
        $region16: #{tpu_custom_call.1} parent=11 // pred_fallthru
          _
      $region12: #{tpu_custom_call.1} parent=5 // pred_fallthru
        _
      %p155 = scmp.lt.s32.totalorder %s16, 9
      // Predicated region
      $region17: #{tpu_custom_call.1} parent=5 // pred_check
        %p156 = pneg %p155
      $region18: #{tpu_custom_call.1} parent=5 // pred_check_branch
        %158 = sbr.rel (%p156) target = $region20
      $region19: #{tpu_custom_call.1} parent=5 // pred_region
        // Predicated region
        $region21: #{tpu_custom_call.1} parent=19 // pred_check
          %p159 = pneg %p50
        $region22: #{tpu_custom_call.1} parent=19 // pred_check_branch
          %161 = sbr.rel (%p159) target = $region24
        $region23: #{tpu_custom_call.1} parent=19 // pred_region
          %s162 = sand.u32 %s40, 1
          %s163 = scalar_lea.sflag [#allocation4], %s162
          %s164 = sand.u32 %s40, 1
          %s165 = smul.addr %s164, 256
          %s166 = scalar_lea.vmem [#allocation3], %s165
          %s167 = smul.u32 8, %s23
          %s168 = smul.u32 4, %s24
          %s170 = ssub.s32 4096, 4096
          %171 = vsyncadd %s163, %s170
          %s172 = smul.addr %s167, 36
          %s173 = sadd.s32 %s168, %s172
          %s174 = smul.addr %s173, 128
          %s175 = scalar_lea.hbm %s0, %s174
          %s176 = sshll.u32 %s166, 4
          %s177 = int_to_ptr.vmem [resolvable:$true] %s176
          %182 = dma.hbm_to_vmem [thread:$0]  %s175, 4096, %s177, %s163, 4608, 512, 32
        $region24: #{tpu_custom_call.1} parent=19 // pred_fallthru
          _
        // Predicated region
        $region25: #{tpu_custom_call.1} parent=19 // pred_check
          %p183 = pneg %p76
        $region26: #{tpu_custom_call.1} parent=19 // pred_check_branch
          %185 = sbr.rel (%p183) target = $region28
        $region27: #{tpu_custom_call.1} parent=19 // pred_region
          %s186 = sand.u32 %s16, 1
          %s187 = scalar_lea.sflag [#allocation7], %s186
          %s188 = sand.u32 %s66, 1
          %s189 = smul.addr %s188, 2048
          %s190 = scalar_lea.vmem [#allocation6], %s189
          %s191 = smul.u32 64, %s24
          %s193 = ssub.s32 32768, 32768
          %194 = vsyncadd %s187, %s193
          %s195 = smul.addr %s191, 4
          %s196 = smul.addr %s195, 128
          %s197 = scalar_lea.hbm %s1, %s196
          %s198 = sshll.u32 %s190, 4
          %s199 = int_to_ptr.vmem [resolvable:$true] %s198
          %204 = dma.hbm_to_vmem [thread:$0]  %s197, 32768, %s199, %s187, 512, 512, 32
        $region28: #{tpu_custom_call.1} parent=19 // pred_fallthru
          _
      $region20: #{tpu_custom_call.1} parent=5 // pred_fallthru
        _
      %p205 = scmp.le.s32.totalorder 1, %s16
      %p206 = scmp.lt.s32.totalorder %s16, 10
      %p207 = pnand %p205, %p206
      %p208 = pneg %p207
      // Predicated region
      $region29: #{tpu_custom_call.1} parent=5 // pred_check
        _
      $region30: #{tpu_custom_call.1} parent=5 // pred_check_branch
        %210 = sbr.rel (%p207) target = $region32
      $region31: #{tpu_custom_call.1} parent=5 // pred_region
        %s211 = ssub.s32 %s16, 1
        %s212 = sand.u32 %s43, 1
        %s213 = scalar_lea.sflag [#allocation4], %s212
        %s214 = sand.u32 %s43, 1
        %s215 = smul.addr %s214, 256
        %s216 = scalar_lea.vmem [#allocation3], %s215
        // Predicated region
        $region33: #{tpu_custom_call.1} parent=31 // pred_check
          %p217 = pneg %p56
        $region34: #{tpu_custom_call.1} parent=31 // pred_check_branch
          %219 = sbr.rel (%p217) target = $region36
        $region35: #{tpu_custom_call.1} parent=31 // pred_region
          %220 = dma.done %s213, 4096
        $region36: #{tpu_custom_call.1} parent=31 // pred_fallthru
          _
        %s221 = sand.u32 %s21, 1
        %s222 = scalar_lea.sflag [#allocation7], %s221
        %s223 = sand.u32 %s69, 1
        %s224 = smul.addr %s223, 2048
        %s225 = scalar_lea.vmem [#allocation6], %s224
        // Predicated region
        $region37: #{tpu_custom_call.1} parent=31 // pred_check
          %p226 = pneg %p82
        $region38: #{tpu_custom_call.1} parent=31 // pred_check_branch
          %228 = sbr.rel (%p226) target = $region40
        $region39: #{tpu_custom_call.1} parent=31 // pred_region
          %229 = dma.done %s222, 32768
        $region40: #{tpu_custom_call.1} parent=31 // pred_fallthru
          _
        // Predicated region
        $region41: #{tpu_custom_call.1} parent=31 // pred_check
          %p230 = pneg %p103
        $region42: #{tpu_custom_call.1} parent=31 // pred_check_branch
          %232 = sbr.rel (%p230) target = $region44
        $region43: #{tpu_custom_call.1} parent=31 // pred_region
          %233 = dma.done [#allocation7], 64
        $region44: #{tpu_custom_call.1} parent=31 // pred_fallthru
          _
        %s234 = sand.u32 %s43, 1
        %s235 = scalar_lea.sflag [#allocation4], %s234
        %s236 = sand.u32 %s43, 1
        %s237 = smul.addr %s236, 256
        %s238 = scalar_lea.vmem [#allocation3], %s237
        %p239 = pneg %p56
        %p240 = pneg %p53
        %s241 = sand.u32 %s21, 1
        %s242 = scalar_lea.sflag [#allocation7], %s241
        %s243 = sand.u32 %s69, 1
        %s244 = smul.addr %s243, 2048
        %s245 = scalar_lea.vmem [#allocation6], %s244
        %p246 = pneg %p82
        %p247 = pneg %p79
        %p248 = pneg %p103
        %p249 = pneg %p100
        %p250 = pneg %p129
        %p251 = pneg %p126
        %s252 = smul.u32 8, %s25
        %s253 = smul.u32 4, %s26
        %s254 = smul.u32 64, %s26
        %s255 = smul.u32 8, %s25
        %p256 = scmp.eq.s32.totalorder %s26, 0
        // Predicated region
        $region45: #{tpu_custom_call.1} parent=31 // pred_check
          %p257 = pneg %p256
        $region46: #{tpu_custom_call.1} parent=31 // pred_check_branch
          %259 = sbr.rel (%p257) target = $region48
        $region47: #{tpu_custom_call.1} parent=31 // pred_region
          %260 = vst [vmem:[#allocation2] sm:$0xff] 0.0
          %261 = vst [vmem:[#allocation2 + $0x8] sm:$0xff] 0.0
          %262 = vst [vmem:[#allocation2 + $0x10] sm:$0xff] 0.0
          %263 = vst [vmem:[#allocation2 + $0x18] sm:$0xff] 0.0
          %264 = vst [vmem:[#allocation2 + $0x20] sm:$0xff] 0.0
          %265 = vst [vmem:[#allocation2 + $0x28] sm:$0xff] 0.0
          %266 = vst [vmem:[#allocation2 + $0x30] sm:$0xff] 0.0
          %267 = vst [vmem:[#allocation2 + $0x38] sm:$0xff] 0.0
          %268 = vst [vmem:[#allocation2 + $0x40] sm:$0xff] 0.0
          %269 = vst [vmem:[#allocation2 + $0x48] sm:$0xff] 0.0
          %270 = vst [vmem:[#allocation2 + $0x50] sm:$0xff] 0.0
          %271 = vst [vmem:[#allocation2 + $0x58] sm:$0xff] 0.0
          %272 = vst [vmem:[#allocation2 + $0x60] sm:$0xff] 0.0
          %273 = vst [vmem:[#allocation2 + $0x68] sm:$0xff] 0.0
          %274 = vst [vmem:[#allocation2 + $0x70] sm:$0xff] 0.0
          %275 = vst [vmem:[#allocation2 + $0x78] sm:$0xff] 0.0
          %276 = vst [vmem:[#allocation2 + $0x80] sm:$0xff] 0.0
          %277 = vst [vmem:[#allocation2 + $0x88] sm:$0xff] 0.0
          %278 = vst [vmem:[#allocation2 + $0x90] sm:$0xff] 0.0
          %279 = vst [vmem:[#allocation2 + $0x98] sm:$0xff] 0.0
          %280 = vst [vmem:[#allocation2 + $0xa0] sm:$0xff] 0.0
          %281 = vst [vmem:[#allocation2 + $0xa8] sm:$0xff] 0.0
          %282 = vst [vmem:[#allocation2 + $0xb0] sm:$0xff] 0.0
          %283 = vst [vmem:[#allocation2 + $0xb8] sm:$0xff] 0.0
          %284 = vst [vmem:[#allocation2 + $0xc0] sm:$0xff] 0.0
          %285 = vst [vmem:[#allocation2 + $0xc8] sm:$0xff] 0.0
          %286 = vst [vmem:[#allocation2 + $0xd0] sm:$0xff] 0.0
          %287 = vst [vmem:[#allocation2 + $0xd8] sm:$0xff] 0.0
          %288 = vst [vmem:[#allocation2 + $0xe0] sm:$0xff] 0.0
          %289 = vst [vmem:[#allocation2 + $0xe8] sm:$0xff] 0.0
          %290 = vst [vmem:[#allocation2 + $0xf0] sm:$0xff] 0.0
          %291 = vst [vmem:[#allocation2 + $0xf8] sm:$0xff] 0.0
        $region48: #{tpu_custom_call.1} parent=31 // pred_fallthru
          _
        %v292 = vld [vmem:[#allocation2] sm:$0xff]
        %v293 = vld [vmem:[#allocation2 + $0x8] sm:$0xff]
        %v294 = vld [vmem:[#allocation2 + $0x10] sm:$0xff]
        %v295 = vld [vmem:[#allocation2 + $0x18] sm:$0xff]
        %v296 = vld [vmem:[#allocation2 + $0x20] sm:$0xff]
        %v297 = vld [vmem:[#allocation2 + $0x28] sm:$0xff]
        %v298 = vld [vmem:[#allocation2 + $0x30] sm:$0xff]
        %v299 = vld [vmem:[#allocation2 + $0x38] sm:$0xff]
        %v300 = vld [vmem:[#allocation2 + $0x40] sm:$0xff]
        %v301 = vld [vmem:[#allocation2 + $0x48] sm:$0xff]
        %v302 = vld [vmem:[#allocation2 + $0x50] sm:$0xff]
        %v303 = vld [vmem:[#allocation2 + $0x58] sm:$0xff]
        %v304 = vld [vmem:[#allocation2 + $0x60] sm:$0xff]
        %v305 = vld [vmem:[#allocation2 + $0x68] sm:$0xff]
        %v306 = vld [vmem:[#allocation2 + $0x70] sm:$0xff]
        %v307 = vld [vmem:[#allocation2 + $0x78] sm:$0xff]
        %v308 = vld [vmem:[#allocation2 + $0x80] sm:$0xff]
        %v309 = vld [vmem:[#allocation2 + $0x88] sm:$0xff]
        %v310 = vld [vmem:[#allocation2 + $0x90] sm:$0xff]
        %v311 = vld [vmem:[#allocation2 + $0x98] sm:$0xff]
        %v312 = vld [vmem:[#allocation2 + $0xa0] sm:$0xff]
        %v313 = vld [vmem:[#allocation2 + $0xa8] sm:$0xff]
        %v314 = vld [vmem:[#allocation2 + $0xb0] sm:$0xff]
        %v315 = vld [vmem:[#allocation2 + $0xb8] sm:$0xff]
        %v316 = vld [vmem:[#allocation2 + $0xc0] sm:$0xff]
        %v317 = vld [vmem:[#allocation2 + $0xc8] sm:$0xff]
        %v318 = vld [vmem:[#allocation2 + $0xd0] sm:$0xff]
        %v319 = vld [vmem:[#allocation2 + $0xd8] sm:$0xff]
        %v320 = vld [vmem:[#allocation2 + $0xe0] sm:$0xff]
        %v321 = vld [vmem:[#allocation2 + $0xe8] sm:$0xff]
        %v322 = vld [vmem:[#allocation2 + $0xf0] sm:$0xff]
        %v323 = vld [vmem:[#allocation2 + $0xf8] sm:$0xff]
        %v324 = vld [vmem:[%s216] sm:$0xff]
        %v325 = vld [vmem:[%s216 + $0x8] sm:$0xff]
        %v326 = vld [vmem:[%s216 + $0x10] sm:$0xff]
        %v327 = vld [vmem:[%s216 + $0x18] sm:$0xff]
        %v328 = vld [vmem:[%s216 + $0x20] sm:$0xff]
        %v329 = vld [vmem:[%s216 + $0x28] sm:$0xff]
        %v330 = vld [vmem:[%s216 + $0x30] sm:$0xff]
        %v331 = vld [vmem:[%s216 + $0x38] sm:$0xff]
        %v332 = vld [vmem:[%s216 + $0x40] sm:$0xff]
        %v333 = vld [vmem:[%s216 + $0x48] sm:$0xff]
        %v334 = vld [vmem:[%s216 + $0x50] sm:$0xff]
        %v335 = vld [vmem:[%s216 + $0x58] sm:$0xff]
        %v336 = vld [vmem:[%s216 + $0x60] sm:$0xff]
        %v337 = vld [vmem:[%s216 + $0x68] sm:$0xff]
        %v338 = vld [vmem:[%s216 + $0x70] sm:$0xff]
        %v339 = vld [vmem:[%s216 + $0x78] sm:$0xff]
        %v340 = vld [vmem:[%s216 + $0x80] sm:$0xff]
        %v341 = vld [vmem:[%s216 + $0x88] sm:$0xff]
        %v342 = vld [vmem:[%s216 + $0x90] sm:$0xff]
        %v343 = vld [vmem:[%s216 + $0x98] sm:$0xff]
        %v344 = vld [vmem:[%s216 + $0xa0] sm:$0xff]
        %v345 = vld [vmem:[%s216 + $0xa8] sm:$0xff]
        %v346 = vld [vmem:[%s216 + $0xb0] sm:$0xff]
        %v347 = vld [vmem:[%s216 + $0xb8] sm:$0xff]
        %v348 = vld [vmem:[%s216 + $0xc0] sm:$0xff]
        %v349 = vld [vmem:[%s216 + $0xc8] sm:$0xff]
        %v350 = vld [vmem:[%s216 + $0xd0] sm:$0xff]
        %v351 = vld [vmem:[%s216 + $0xd8] sm:$0xff]
        %v352 = vld [vmem:[%s216 + $0xe0] sm:$0xff]
        %v353 = vld [vmem:[%s216 + $0xe8] sm:$0xff]
        %v354 = vld [vmem:[%s216 + $0xf0] sm:$0xff]
        %v355 = vld [vmem:[%s216 + $0xf8] sm:$0xff]
        %v356 = vld [vmem:[%s225] sm:$0xff]
        %v357 = vld [vmem:[%s225 + $0x8] sm:$0xff]
        %v358 = vld [vmem:[%s225 + $0x10] sm:$0xff]
        %v359 = vld [vmem:[%s225 + $0x18] sm:$0xff]
        %v360 = vld [vmem:[%s225 + $0x20] sm:$0xff]
        %v361 = vld [vmem:[%s225 + $0x28] sm:$0xff]
        %v362 = vld [vmem:[%s225 + $0x30] sm:$0xff]
        %v363 = vld [vmem:[%s225 + $0x38] sm:$0xff]
        %v364 = vld [vmem:[%s225 + $0x40] sm:$0xff]
        %v365 = vld [vmem:[%s225 + $0x48] sm:$0xff]
        %v366 = vld [vmem:[%s225 + $0x50] sm:$0xff]
        %v367 = vld [vmem:[%s225 + $0x58] sm:$0xff]
        %v368 = vld [vmem:[%s225 + $0x60] sm:$0xff]
        %v369 = vld [vmem:[%s225 + $0x68] sm:$0xff]
        %v370 = vld [vmem:[%s225 + $0x70] sm:$0xff]
        %v371 = vld [vmem:[%s225 + $0x78] sm:$0xff]
        %v372 = vld [vmem:[%s225 + $0x80] sm:$0xff]
        %v373 = vld [vmem:[%s225 + $0x88] sm:$0xff]
        %v374 = vld [vmem:[%s225 + $0x90] sm:$0xff]
        %v375 = vld [vmem:[%s225 + $0x98] sm:$0xff]
        %v376 = vld [vmem:[%s225 + $0xa0] sm:$0xff]
        %v377 = vld [vmem:[%s225 + $0xa8] sm:$0xff]
        %v378 = vld [vmem:[%s225 + $0xb0] sm:$0xff]
        %v379 = vld [vmem:[%s225 + $0xb8] sm:$0xff]
        %v380 = vld [vmem:[%s225 + $0xc0] sm:$0xff]
        %v381 = vld [vmem:[%s225 + $0xc8] sm:$0xff]
        %v382 = vld [vmem:[%s225 + $0xd0] sm:$0xff]
        %v383 = vld [vmem:[%s225 + $0xd8] sm:$0xff]
        %v384 = vld [vmem:[%s225 + $0xe0] sm:$0xff]
        %v385 = vld [vmem:[%s225 + $0xe8] sm:$0xff]
        %v386 = vld [vmem:[%s225 + $0xf0] sm:$0xff]
        %v387 = vld [vmem:[%s225 + $0xf8] sm:$0xff]
        %v388 = vld [vmem:[%s225 + $0x100] sm:$0xff]
        %v389 = vld [vmem:[%s225 + $0x108] sm:$0xff]
        %v390 = vld [vmem:[%s225 + $0x110] sm:$0xff]
        %v391 = vld [vmem:[%s225 + $0x118] sm:$0xff]
        %v392 = vld [vmem:[%s225 + $0x120] sm:$0xff]
        %v393 = vld [vmem:[%s225 + $0x128] sm:$0xff]
        %v394 = vld [vmem:[%s225 + $0x130] sm:$0xff]
        %v395 = vld [vmem:[%s225 + $0x138] sm:$0xff]
        %v396 = vld [vmem:[%s225 + $0x140] sm:$0xff]
        %v397 = vld [vmem:[%s225 + $0x148] sm:$0xff]
        %v398 = vld [vmem:[%s225 + $0x150] sm:$0xff]
        %v399 = vld [vmem:[%s225 + $0x158] sm:$0xff]
        %v400 = vld [vmem:[%s225 + $0x160] sm:$0xff]
        %v401 = vld [vmem:[%s225 + $0x168] sm:$0xff]
        %v402 = vld [vmem:[%s225 + $0x170] sm:$0xff]
        %v403 = vld [vmem:[%s225 + $0x178] sm:$0xff]
        %v404 = vld [vmem:[%s225 + $0x180] sm:$0xff]
        %v405 = vld [vmem:[%s225 + $0x188] sm:$0xff]
        %v406 = vld [vmem:[%s225 + $0x190] sm:$0xff]
        %v407 = vld [vmem:[%s225 + $0x198] sm:$0xff]
        %v408 = vld [vmem:[%s225 + $0x1a0] sm:$0xff]
        %v409 = vld [vmem:[%s225 + $0x1a8] sm:$0xff]
        %v410 = vld [vmem:[%s225 + $0x1b0] sm:$0xff]
        %v411 = vld [vmem:[%s225 + $0x1b8] sm:$0xff]
        %v412 = vld [vmem:[%s225 + $0x1c0] sm:$0xff]
        %v413 = vld [vmem:[%s225 + $0x1c8] sm:$0xff]
        %v414 = vld [vmem:[%s225 + $0x1d0] sm:$0xff]
        %v415 = vld [vmem:[%s225 + $0x1d8] sm:$0xff]
        %v416 = vld [vmem:[%s225 + $0x1e0] sm:$0xff]
        %v417 = vld [vmem:[%s225 + $0x1e8] sm:$0xff]
        %v418 = vld [vmem:[%s225 + $0x1f0] sm:$0xff]
        %v419 = vld [vmem:[%s225 + $0x1f8] sm:$0xff]
        %v420 = vld [vmem:[%s225 + $0x200] sm:$0xff]
        %v421 = vld [vmem:[%s225 + $0x208] sm:$0xff]
        %v422 = vld [vmem:[%s225 + $0x210] sm:$0xff]
        %v423 = vld [vmem:[%s225 + $0x218] sm:$0xff]
        %v424 = vld [vmem:[%s225 + $0x220] sm:$0xff]
        %v425 = vld [vmem:[%s225 + $0x228] sm:$0xff]
        %v426 = vld [vmem:[%s225 + $0x230] sm:$0xff]
        %v427 = vld [vmem:[%s225 + $0x238] sm:$0xff]
        %v428 = vld [vmem:[%s225 + $0x240] sm:$0xff]
        %v429 = vld [vmem:[%s225 + $0x248] sm:$0xff]
        %v430 = vld [vmem:[%s225 + $0x250] sm:$0xff]
        %v431 = vld [vmem:[%s225 + $0x258] sm:$0xff]
        %v432 = vld [vmem:[%s225 + $0x260] sm:$0xff]
        %v433 = vld [vmem:[%s225 + $0x268] sm:$0xff]
        %v434 = vld [vmem:[%s225 + $0x270] sm:$0xff]
        %v435 = vld [vmem:[%s225 + $0x278] sm:$0xff]
        %v436 = vld [vmem:[%s225 + $0x280] sm:$0xff]
        %v437 = vld [vmem:[%s225 + $0x288] sm:$0xff]
        %v438 = vld [vmem:[%s225 + $0x290] sm:$0xff]
        %v439 = vld [vmem:[%s225 + $0x298] sm:$0xff]
        %v440 = vld [vmem:[%s225 + $0x2a0] sm:$0xff]
        %v441 = vld [vmem:[%s225 + $0x2a8] sm:$0xff]
        %v442 = vld [vmem:[%s225 + $0x2b0] sm:$0xff]
        %v443 = vld [vmem:[%s225 + $0x2b8] sm:$0xff]
        %v444 = vld [vmem:[%s225 + $0x2c0] sm:$0xff]
        %v445 = vld [vmem:[%s225 + $0x2c8] sm:$0xff]
        %v446 = vld [vmem:[%s225 + $0x2d0] sm:$0xff]
        %v447 = vld [vmem:[%s225 + $0x2d8] sm:$0xff]
        %v448 = vld [vmem:[%s225 + $0x2e0] sm:$0xff]
        %v449 = vld [vmem:[%s225 + $0x2e8] sm:$0xff]
        %v450 = vld [vmem:[%s225 + $0x2f0] sm:$0xff]
        %v451 = vld [vmem:[%s225 + $0x2f8] sm:$0xff]
        %v452 = vld [vmem:[%s225 + $0x300] sm:$0xff]
        %v453 = vld [vmem:[%s225 + $0x308] sm:$0xff]
        %v454 = vld [vmem:[%s225 + $0x310] sm:$0xff]
        %v455 = vld [vmem:[%s225 + $0x318] sm:$0xff]
        %v456 = vld [vmem:[%s225 + $0x320] sm:$0xff]
        %v457 = vld [vmem:[%s225 + $0x328] sm:$0xff]
        %v458 = vld [vmem:[%s225 + $0x330] sm:$0xff]
        %v459 = vld [vmem:[%s225 + $0x338] sm:$0xff]
        %v460 = vld [vmem:[%s225 + $0x340] sm:$0xff]
        %v461 = vld [vmem:[%s225 + $0x348] sm:$0xff]
        %v462 = vld [vmem:[%s225 + $0x350] sm:$0xff]
        %v463 = vld [vmem:[%s225 + $0x358] sm:$0xff]
        %v464 = vld [vmem:[%s225 + $0x360] sm:$0xff]
        %v465 = vld [vmem:[%s225 + $0x368] sm:$0xff]
        %v466 = vld [vmem:[%s225 + $0x370] sm:$0xff]
        %v467 = vld [vmem:[%s225 + $0x378] sm:$0xff]
        %v468 = vld [vmem:[%s225 + $0x380] sm:$0xff]
        %v469 = vld [vmem:[%s225 + $0x388] sm:$0xff]
        %v470 = vld [vmem:[%s225 + $0x390] sm:$0xff]
        %v471 = vld [vmem:[%s225 + $0x398] sm:$0xff]
        %v472 = vld [vmem:[%s225 + $0x3a0] sm:$0xff]
        %v473 = vld [vmem:[%s225 + $0x3a8] sm:$0xff]
        %v474 = vld [vmem:[%s225 + $0x3b0] sm:$0xff]
        %v475 = vld [vmem:[%s225 + $0x3b8] sm:$0xff]
        %v476 = vld [vmem:[%s225 + $0x3c0] sm:$0xff]
        %v477 = vld [vmem:[%s225 + $0x3c8] sm:$0xff]
        %v478 = vld [vmem:[%s225 + $0x3d0] sm:$0xff]
        %v479 = vld [vmem:[%s225 + $0x3d8] sm:$0xff]
        %v480 = vld [vmem:[%s225 + $0x3e0] sm:$0xff]
        %v481 = vld [vmem:[%s225 + $0x3e8] sm:$0xff]
        %v482 = vld [vmem:[%s225 + $0x3f0] sm:$0xff]
        %v483 = vld [vmem:[%s225 + $0x3f8] sm:$0xff]
        %v484 = vld [vmem:[%s225 + $0x400] sm:$0xff]
        %v485 = vld [vmem:[%s225 + $0x408] sm:$0xff]
        %v486 = vld [vmem:[%s225 + $0x410] sm:$0xff]
        %v487 = vld [vmem:[%s225 + $0x418] sm:$0xff]
        %v488 = vld [vmem:[%s225 + $0x420] sm:$0xff]
        %v489 = vld [vmem:[%s225 + $0x428] sm:$0xff]
        %v490 = vld [vmem:[%s225 + $0x430] sm:$0xff]
        %v491 = vld [vmem:[%s225 + $0x438] sm:$0xff]
        %v492 = vld [vmem:[%s225 + $0x440] sm:$0xff]
        %v493 = vld [vmem:[%s225 + $0x448] sm:$0xff]
        %v494 = vld [vmem:[%s225 + $0x450] sm:$0xff]
        %v495 = vld [vmem:[%s225 + $0x458] sm:$0xff]
        %v496 = vld [vmem:[%s225 + $0x460] sm:$0xff]
        %v497 = vld [vmem:[%s225 + $0x468] sm:$0xff]
        %v498 = vld [vmem:[%s225 + $0x470] sm:$0xff]
        %v499 = vld [vmem:[%s225 + $0x478] sm:$0xff]
        %v500 = vld [vmem:[%s225 + $0x480] sm:$0xff]
        %v501 = vld [vmem:[%s225 + $0x488] sm:$0xff]
        %v502 = vld [vmem:[%s225 + $0x490] sm:$0xff]
        %v503 = vld [vmem:[%s225 + $0x498] sm:$0xff]
        %v504 = vld [vmem:[%s225 + $0x4a0] sm:$0xff]
        %v505 = vld [vmem:[%s225 + $0x4a8] sm:$0xff]
        %v506 = vld [vmem:[%s225 + $0x4b0] sm:$0xff]
        %v507 = vld [vmem:[%s225 + $0x4b8] sm:$0xff]
        %v508 = vld [vmem:[%s225 + $0x4c0] sm:$0xff]
        %v509 = vld [vmem:[%s225 + $0x4c8] sm:$0xff]
        %v510 = vld [vmem:[%s225 + $0x4d0] sm:$0xff]
        %v511 = vld [vmem:[%s225 + $0x4d8] sm:$0xff]
        %v512 = vld [vmem:[%s225 + $0x4e0] sm:$0xff]
        %v513 = vld [vmem:[%s225 + $0x4e8] sm:$0xff]
        %v514 = vld [vmem:[%s225 + $0x4f0] sm:$0xff]
        %v515 = vld [vmem:[%s225 + $0x4f8] sm:$0xff]
        %v516 = vld [vmem:[%s225 + $0x500] sm:$0xff]
        %v517 = vld [vmem:[%s225 + $0x508] sm:$0xff]
        %v518 = vld [vmem:[%s225 + $0x510] sm:$0xff]
        %v519 = vld [vmem:[%s225 + $0x518] sm:$0xff]
        %v520 = vld [vmem:[%s225 + $0x520] sm:$0xff]
        %v521 = vld [vmem:[%s225 + $0x528] sm:$0xff]
        %v522 = vld [vmem:[%s225 + $0x530] sm:$0xff]
        %v523 = vld [vmem:[%s225 + $0x538] sm:$0xff]
        %v524 = vld [vmem:[%s225 + $0x540] sm:$0xff]
        %v525 = vld [vmem:[%s225 + $0x548] sm:$0xff]
        %v526 = vld [vmem:[%s225 + $0x550] sm:$0xff]
        %v527 = vld [vmem:[%s225 + $0x558] sm:$0xff]
        %v528 = vld [vmem:[%s225 + $0x560] sm:$0xff]
        %v529 = vld [vmem:[%s225 + $0x568] sm:$0xff]
        %v530 = vld [vmem:[%s225 + $0x570] sm:$0xff]
        %v531 = vld [vmem:[%s225 + $0x578] sm:$0xff]
        %v532 = vld [vmem:[%s225 + $0x580] sm:$0xff]
        %v533 = vld [vmem:[%s225 + $0x588] sm:$0xff]
        %v534 = vld [vmem:[%s225 + $0x590] sm:$0xff]
        %v535 = vld [vmem:[%s225 + $0x598] sm:$0xff]
        %v536 = vld [vmem:[%s225 + $0x5a0] sm:$0xff]
        %v537 = vld [vmem:[%s225 + $0x5a8] sm:$0xff]
        %v538 = vld [vmem:[%s225 + $0x5b0] sm:$0xff]
        %v539 = vld [vmem:[%s225 + $0x5b8] sm:$0xff]
        %v540 = vld [vmem:[%s225 + $0x5c0] sm:$0xff]
        %v541 = vld [vmem:[%s225 + $0x5c8] sm:$0xff]
        %v542 = vld [vmem:[%s225 + $0x5d0] sm:$0xff]
        %v543 = vld [vmem:[%s225 + $0x5d8] sm:$0xff]
        %v544 = vld [vmem:[%s225 + $0x5e0] sm:$0xff]
        %v545 = vld [vmem:[%s225 + $0x5e8] sm:$0xff]
        %v546 = vld [vmem:[%s225 + $0x5f0] sm:$0xff]
        %v547 = vld [vmem:[%s225 + $0x5f8] sm:$0xff]
        %v548 = vld [vmem:[%s225 + $0x600] sm:$0xff]
        %v549 = vld [vmem:[%s225 + $0x608] sm:$0xff]
        %v550 = vld [vmem:[%s225 + $0x610] sm:$0xff]
        %v551 = vld [vmem:[%s225 + $0x618] sm:$0xff]
        %v552 = vld [vmem:[%s225 + $0x620] sm:$0xff]
        %v553 = vld [vmem:[%s225 + $0x628] sm:$0xff]
        %v554 = vld [vmem:[%s225 + $0x630] sm:$0xff]
        %v555 = vld [vmem:[%s225 + $0x638] sm:$0xff]
        %v556 = vld [vmem:[%s225 + $0x640] sm:$0xff]
        %v557 = vld [vmem:[%s225 + $0x648] sm:$0xff]
        %v558 = vld [vmem:[%s225 + $0x650] sm:$0xff]
        %v559 = vld [vmem:[%s225 + $0x658] sm:$0xff]
        %v560 = vld [vmem:[%s225 + $0x660] sm:$0xff]
        %v561 = vld [vmem:[%s225 + $0x668] sm:$0xff]
        %v562 = vld [vmem:[%s225 + $0x670] sm:$0xff]
        %v563 = vld [vmem:[%s225 + $0x678] sm:$0xff]
        %v564 = vld [vmem:[%s225 + $0x680] sm:$0xff]
        %v565 = vld [vmem:[%s225 + $0x688] sm:$0xff]
        %v566 = vld [vmem:[%s225 + $0x690] sm:$0xff]
        %v567 = vld [vmem:[%s225 + $0x698] sm:$0xff]
        %v568 = vld [vmem:[%s225 + $0x6a0] sm:$0xff]
        %v569 = vld [vmem:[%s225 + $0x6a8] sm:$0xff]
        %v570 = vld [vmem:[%s225 + $0x6b0] sm:$0xff]
        %v571 = vld [vmem:[%s225 + $0x6b8] sm:$0xff]
        %v572 = vld [vmem:[%s225 + $0x6c0] sm:$0xff]
        %v573 = vld [vmem:[%s225 + $0x6c8] sm:$0xff]
        %v574 = vld [vmem:[%s225 + $0x6d0] sm:$0xff]
        %v575 = vld [vmem:[%s225 + $0x6d8] sm:$0xff]
        %v576 = vld [vmem:[%s225 + $0x6e0] sm:$0xff]
        %v577 = vld [vmem:[%s225 + $0x6e8] sm:$0xff]
        %v578 = vld [vmem:[%s225 + $0x6f0] sm:$0xff]
        %v579 = vld [vmem:[%s225 + $0x6f8] sm:$0xff]
        %v580 = vld [vmem:[%s225 + $0x700] sm:$0xff]
        %v581 = vld [vmem:[%s225 + $0x708] sm:$0xff]
        %v582 = vld [vmem:[%s225 + $0x710] sm:$0xff]
        %v583 = vld [vmem:[%s225 + $0x718] sm:$0xff]
        %v584 = vld [vmem:[%s225 + $0x720] sm:$0xff]
        %v585 = vld [vmem:[%s225 + $0x728] sm:$0xff]
        %v586 = vld [vmem:[%s225 + $0x730] sm:$0xff]
        %v587 = vld [vmem:[%s225 + $0x738] sm:$0xff]
        %v588 = vld [vmem:[%s225 + $0x740] sm:$0xff]
        %v589 = vld [vmem:[%s225 + $0x748] sm:$0xff]
        %v590 = vld [vmem:[%s225 + $0x750] sm:$0xff]
        %v591 = vld [vmem:[%s225 + $0x758] sm:$0xff]
        %v592 = vld [vmem:[%s225 + $0x760] sm:$0xff]
        %v593 = vld [vmem:[%s225 + $0x768] sm:$0xff]
        %v594 = vld [vmem:[%s225 + $0x770] sm:$0xff]
        %v595 = vld [vmem:[%s225 + $0x778] sm:$0xff]
        %v596 = vld [vmem:[%s225 + $0x780] sm:$0xff]
        %v597 = vld [vmem:[%s225 + $0x788] sm:$0xff]
        %v598 = vld [vmem:[%s225 + $0x790] sm:$0xff]
        %v599 = vld [vmem:[%s225 + $0x798] sm:$0xff]
        %v600 = vld [vmem:[%s225 + $0x7a0] sm:$0xff]
        %v601 = vld [vmem:[%s225 + $0x7a8] sm:$0xff]
        %v602 = vld [vmem:[%s225 + $0x7b0] sm:$0xff]
        %v603 = vld [vmem:[%s225 + $0x7b8] sm:$0xff]
        %v604 = vld [vmem:[%s225 + $0x7c0] sm:$0xff]
        %v605 = vld [vmem:[%s225 + $0x7c8] sm:$0xff]
        %v606 = vld [vmem:[%s225 + $0x7d0] sm:$0xff]
        %v607 = vld [vmem:[%s225 + $0x7d8] sm:$0xff]
        %v608 = vld [vmem:[%s225 + $0x7e0] sm:$0xff]
        %v609 = vld [vmem:[%s225 + $0x7e8] sm:$0xff]
        %v610 = vld [vmem:[%s225 + $0x7f0] sm:$0xff]
        %v611 = vld [vmem:[%s225 + $0x7f8] sm:$0xff]
        %612 = vmatprep.subr.mxu0 %v357
        %613 = vmatpush1.msra.mxu0 %v356
        %614 = vmatprep.subr.mxu0 %v361
        %615 = vmatpush1.msra.mxu0 %v360
        %616 = vmatprep.subr.mxu0 %v365
        %617 = vmatpush1.msra.mxu0 %v364
        %618 = vmatprep.subr.mxu0 %v369
        %619 = vmatpush1.msra.mxu0 %v368
        %620 = vmatprep.subr.mxu0 %v373
        %621 = vmatpush1.msra.mxu0 %v372
        %622 = vmatprep.subr.mxu0 %v377
        %623 = vmatpush1.msra.mxu0 %v376
        %624 = vmatprep.subr.mxu0 %v381
        %625 = vmatpush1.msra.mxu0 %v380
        %626 = vmatprep.subr.mxu0 %v385
        %627 = vmatpush1.msra.mxu0 %v384
        %628 = vmatprep.subr.mxu0 %v389
        %629 = vmatpush1.msra.mxu0 %v388
        %630 = vmatprep.subr.mxu0 %v393
        %631 = vmatpush1.msra.mxu0 %v392
        %632 = vmatprep.subr.mxu0 %v397
        %633 = vmatpush1.msra.mxu0 %v396
        %634 = vmatprep.subr.mxu0 %v401
        %635 = vmatpush1.msra.mxu0 %v400
        %636 = vmatprep.subr.mxu0 %v405
        %637 = vmatpush1.msra.mxu0 %v404
        %638 = vmatprep.subr.mxu0 %v409
        %639 = vmatpush1.msra.mxu0 %v408
        %640 = vmatprep.subr.mxu0 %v413
        %641 = vmatpush1.msra.mxu0 %v412
        %642 = vmatprep.subr.mxu0 %v417
        %643 = vmatpush1.msra.mxu0 %v416
        %644 = vmatprep.subr.mxu0 %v421
        %645 = vmatpush1.msra.mxu0 %v420
        %646 = vmatprep.subr.mxu0 %v425
        %647 = vmatpush1.msra.mxu0 %v424
        %648 = vmatprep.subr.mxu0 %v429
        %649 = vmatpush1.msra.mxu0 %v428
        %650 = vmatprep.subr.mxu0 %v433
        %651 = vmatpush1.msra.mxu0 %v432
        %652 = vmatprep.subr.mxu0 %v437
        %653 = vmatpush1.msra.mxu0 %v436
        %654 = vmatprep.subr.mxu0 %v441
        %655 = vmatpush1.msra.mxu0 %v440
        %656 = vmatprep.subr.mxu0 %v445
        %657 = vmatpush1.msra.mxu0 %v444
        %658 = vmatprep.subr.mxu0 %v449
        %659 = vmatpush1.msra.mxu0 %v448
        %660 = vmatprep.subr.mxu0 %v453
        %661 = vmatpush1.msra.mxu0 %v452
        %662 = vmatprep.subr.mxu0 %v457
        %663 = vmatpush1.msra.mxu0 %v456
        %664 = vmatprep.subr.mxu0 %v461
        %665 = vmatpush1.msra.mxu0 %v460
        %666 = vmatprep.subr.mxu0 %v465
        %667 = vmatpush1.msra.mxu0 %v464
        %668 = vmatprep.subr.mxu0 %v469
        %669 = vmatpush1.msra.mxu0 %v468
        %670 = vmatprep.subr.mxu0 %v473
        %671 = vmatpush1.msra.mxu0 %v472
        %672 = vmatprep.subr.mxu0 %v477
        %673 = vmatpush1.msra.mxu0 %v476
        %674 = vmatprep.subr.mxu0 %v481
        %675 = vmatpush1.msra.mxu0 %v480
        %676 = vmatprep.mubr.f32.mxu0 %v325
        %677 = vmatmul.mubr.f32.gmra.mrb[0].mxu0 %v324
        %v678 = vpop.f32.mrb[0].mxu0
        %v679 = vadd.f32 0.0, %v678
        %v680 = vpop.f32.mrb[0].mxu0
        %v681 = vadd.f32 0.0, %v680
        %682 = vmatprep.mubr.f32.mxu0 %v329
        %683 = vmatmul.mubr.f32.gmra.mrb[0].mxu0 %v328
        %v684 = vpop.f32.mrb[0].mxu0
        %v685 = vadd.f32 0.0, %v684
        %v686 = vpop.f32.mrb[0].mxu0
        %v687 = vadd.f32 0.0, %v686
        %688 = vmatprep.mubr.f32.mxu0 %v333
        %689 = vmatmul.mubr.f32.gmra.mrb[0].mxu0 %v332
        %v690 = vpop.f32.mrb[0].mxu0
        %v691 = vadd.f32 0.0, %v690
        %v692 = vpop.f32.mrb[0].mxu0
        %v693 = vadd.f32 0.0, %v692
        %694 = vmatprep.mubr.f32.mxu0 %v337
        %695 = vmatmul.mubr.f32.gmra.mrb[0].mxu0 %v336
        %v696 = vpop.f32.mrb[0].mxu0
        %v697 = vadd.f32 0.0, %v696
        %v698 = vpop.f32.mrb[0].mxu0
        %v699 = vadd.f32 0.0, %v698
        %700 = vmatprep.mubr.f32.mxu0 %v341
        %701 = vmatmul.mubr.f32.gmra.mrb[0].mxu0 %v340
        %v702 = vpop.f32.mrb[0].mxu0
        %v703 = vadd.f32 0.0, %v702
        %v704 = vpop.f32.mrb[0].mxu0
        %v705 = vadd.f32 0.0, %v704
        %706 = vmatprep.mubr.f32.mxu0 %v345
        %707 = vmatmul.mubr.f32.gmra.mrb[0].mxu0 %v344
        %v708 = vpop.f32.mrb[0].mxu0
        %v709 = vadd.f32 0.0, %v708
        %v710 = vpop.f32.mrb[0].mxu0
        %v711 = vadd.f32 0.0, %v710
        %712 = vmatprep.mubr.f32.mxu0 %v349
        %713 = vmatmul.mubr.f32.gmra.mrb[0].mxu0 %v348
        %v714 = vpop.f32.mrb[0].mxu0
        %v715 = vadd.f32 0.0, %v714
        %v716 = vpop.f32.mrb[0].mxu0
        %v717 = vadd.f32 0.0, %v716
        %718 = vmatprep.mubr.f32.mxu0 %v353
        %719 = vmatmul.mubr.f32.gmra.mrb[0].mxu0 %v352
        %v720 = vpop.f32.mrb[0].mxu0
        %v721 = vadd.f32 0.0, %v720
        %v722 = vpop.f32.mrb[0].mxu0
        %v723 = vadd.f32 0.0, %v722
        %724 = vdwg.mxu0
        %725 = vmatprep.subr.mxu0 %v485
        %726 = vmatpush1.msra.mxu0 %v484
        %727 = vmatprep.subr.mxu0 %v489
        %728 = vmatpush1.msra.mxu0 %v488
        %729 = vmatprep.subr.mxu0 %v493
        %730 = vmatpush1.msra.mxu0 %v492
        %731 = vmatprep.subr.mxu0 %v497
        %732 = vmatpush1.msra.mxu0 %v496
        %733 = vmatprep.subr.mxu0 %v501
        %734 = vmatpush1.msra.mxu0 %v500
        %735 = vmatprep.subr.mxu0 %v505
        %736 = vmatpush1.msra.mxu0 %v504
        %737 = vmatprep.subr.mxu0 %v509
        %738 = vmatpush1.msra.mxu0 %v508
        %739 = vmatprep.subr.mxu0 %v513
        %740 = vmatpush1.msra.mxu0 %v512
        %741 = vmatprep.subr.mxu0 %v517
        %742 = vmatpush1.msra.mxu0 %v516
        %743 = vmatprep.subr.mxu0 %v521
        %744 = vmatpush1.msra.mxu0 %v520
        %745 = vmatprep.subr.mxu0 %v525
        %746 = vmatpush1.msra.mxu0 %v524
        %747 = vmatprep.subr.mxu0 %v529
        %748 = vmatpush1.msra.mxu0 %v528
        %749 = vmatprep.subr.mxu0 %v533
        %750 = vmatpush1.msra.mxu0 %v532
        %751 = vmatprep.subr.mxu0 %v537
        %752 = vmatpush1.msra.mxu0 %v536
        %753 = vmatprep.subr.mxu0 %v541
        %754 = vmatpush1.msra.mxu0 %v540
        %755 = vmatprep.subr.mxu0 %v545
        %756 = vmatpush1.msra.mxu0 %v544
        %757 = vmatprep.subr.mxu0 %v549
        %758 = vmatpush1.msra.mxu0 %v548
        %759 = vmatprep.subr.mxu0 %v553
        %760 = vmatpush1.msra.mxu0 %v552
        %761 = vmatprep.subr.mxu0 %v557
        %762 = vmatpush1.msra.mxu0 %v556
        %763 = vmatprep.subr.mxu0 %v561
        %764 = vmatpush1.msra.mxu0 %v560
        %765 = vmatprep.subr.mxu0 %v565
        %766 = vmatpush1.msra.mxu0 %v564
        %767 = vmatprep.subr.mxu0 %v569
        %768 = vmatpush1.msra.mxu0 %v568
        %769 = vmatprep.subr.mxu0 %v573
        %770 = vmatpush1.msra.mxu0 %v572
        %771 = vmatprep.subr.mxu0 %v577
        %772 = vmatpush1.msra.mxu0 %v576
        %773 = vmatprep.subr.mxu0 %v581
        %774 = vmatpush1.msra.mxu0 %v580
        %775 = vmatprep.subr.mxu0 %v585
        %776 = vmatpush1.msra.mxu0 %v584
        %777 = vmatprep.subr.mxu0 %v589
        %778 = vmatpush1.msra.mxu0 %v588
        %779 = vmatprep.subr.mxu0 %v593
        %780 = vmatpush1.msra.mxu0 %v592
        %781 = vmatprep.subr.mxu0 %v597
        %782 = vmatpush1.msra.mxu0 %v596
        %783 = vmatprep.subr.mxu0 %v601
        %784 = vmatpush1.msra.mxu0 %v600
        %785 = vmatprep.subr.mxu0 %v605
        %786 = vmatpush1.msra.mxu0 %v604
        %787 = vmatprep.subr.mxu0 %v609
        %788 = vmatpush1.msra.mxu0 %v608
        %789 = vmatprep.mubr.f32.mxu0 %v327
        %790 = vmatmul.mubr.f32.gmra.mrb[0].mxu0 %v326
        %v791 = vpop.f32.mrb[0].mxu0
        %v792 = vadd.f32 %v679, %v791
        %v793 = vpop.f32.mrb[0].mxu0
        %v794 = vadd.f32 %v681, %v793
        %795 = vmatprep.mubr.f32.mxu0 %v331
        %796 = vmatmul.mubr.f32.gmra.mrb[0].mxu0 %v330
        %v797 = vpop.f32.mrb[0].mxu0
        %v798 = vadd.f32 %v685, %v797
        %v799 = vpop.f32.mrb[0].mxu0
        %v800 = vadd.f32 %v687, %v799
        %801 = vmatprep.mubr.f32.mxu0 %v335
        %802 = vmatmul.mubr.f32.gmra.mrb[0].mxu0 %v334
        %v803 = vpop.f32.mrb[0].mxu0
        %v804 = vadd.f32 %v691, %v803
        %v805 = vpop.f32.mrb[0].mxu0
        %v806 = vadd.f32 %v693, %v805
        %807 = vmatprep.mubr.f32.mxu0 %v339
        %808 = vmatmul.mubr.f32.gmra.mrb[0].mxu0 %v338
        %v809 = vpop.f32.mrb[0].mxu0
        %v810 = vadd.f32 %v697, %v809
        %v811 = vpop.f32.mrb[0].mxu0
        %v812 = vadd.f32 %v699, %v811
        %813 = vmatprep.mubr.f32.mxu0 %v343
        %814 = vmatmul.mubr.f32.gmra.mrb[0].mxu0 %v342
        %v815 = vpop.f32.mrb[0].mxu0
        %v816 = vadd.f32 %v703, %v815
        %v817 = vpop.f32.mrb[0].mxu0
        %v818 = vadd.f32 %v705, %v817
        %819 = vmatprep.mubr.f32.mxu0 %v347
        %820 = vmatmul.mubr.f32.gmra.mrb[0].mxu0 %v346
        %v821 = vpop.f32.mrb[0].mxu0
        %v822 = vadd.f32 %v709, %v821
        %v823 = vpop.f32.mrb[0].mxu0
        %v824 = vadd.f32 %v711, %v823
        %825 = vmatprep.mubr.f32.mxu0 %v351
        %826 = vmatmul.mubr.f32.gmra.mrb[0].mxu0 %v350
        %v827 = vpop.f32.mrb[0].mxu0
        %v828 = vadd.f32 %v715, %v827
        %v829 = vpop.f32.mrb[0].mxu0
        %v830 = vadd.f32 %v717, %v829
        %831 = vmatprep.mubr.f32.mxu0 %v355
        %832 = vmatmul.mubr.f32.gmra.mrb[0].mxu0 %v354
        %v833 = vpop.f32.mrb[0].mxu0
        %v834 = vadd.f32 %v721, %v833
        %v835 = vpop.f32.mrb[0].mxu0
        %v836 = vadd.f32 %v723, %v835
        %837 = vdwg.mxu0
        %838 = vmatprep.subr.mxu0 %v359
        %839 = vmatpush1.msra.mxu0 %v358
        %840 = vmatprep.subr.mxu0 %v363
        %841 = vmatpush1.msra.mxu0 %v362
        %842 = vmatprep.subr.mxu0 %v367
        %843 = vmatpush1.msra.mxu0 %v366
        %844 = vmatprep.subr.mxu0 %v371
        %845 = vmatpush1.msra.mxu0 %v370
        %846 = vmatprep.subr.mxu0 %v375
        %847 = vmatpush1.msra.mxu0 %v374
        %848 = vmatprep.subr.mxu0 %v379
        %849 = vmatpush1.msra.mxu0 %v378
        %850 = vmatprep.subr.mxu0 %v383
        %851 = vmatpush1.msra.mxu0 %v382
        %852 = vmatprep.subr.mxu0 %v387
        %853 = vmatpush1.msra.mxu0 %v386
        %854 = vmatprep.subr.mxu0 %v391
        %855 = vmatpush1.msra.mxu0 %v390
        %856 = vmatprep.subr.mxu0 %v395
        %857 = vmatpush1.msra.mxu0 %v394
        %858 = vmatprep.subr.mxu0 %v399
        %859 = vmatpush1.msra.mxu0 %v398
        %860 = vmatprep.subr.mxu0 %v403
        %861 = vmatpush1.msra.mxu0 %v402
        %862 = vmatprep.subr.mxu0 %v407
        %863 = vmatpush1.msra.mxu0 %v406
        %864 = vmatprep.subr.mxu0 %v411
        %865 = vmatpush1.msra.mxu0 %v410
        %866 = vmatprep.subr.mxu0 %v415
        %867 = vmatpush1.msra.mxu0 %v414
        %868 = vmatprep.subr.mxu0 %v419
        %869 = vmatpush1.msra.mxu0 %v418
        %870 = vmatprep.subr.mxu0 %v423
        %871 = vmatpush1.msra.mxu0 %v422
        %872 = vmatprep.subr.mxu0 %v427
        %873 = vmatpush1.msra.mxu0 %v426
        %874 = vmatprep.subr.mxu0 %v431
        %875 = vmatpush1.msra.mxu0 %v430
        %876 = vmatprep.subr.mxu0 %v435
        %877 = vmatpush1.msra.mxu0 %v434
        %878 = vmatprep.subr.mxu0 %v439
        %879 = vmatpush1.msra.mxu0 %v438
        %880 = vmatprep.subr.mxu0 %v443
        %881 = vmatpush1.msra.mxu0 %v442
        %882 = vmatprep.subr.mxu0 %v447
        %883 = vmatpush1.msra.mxu0 %v446
        %884 = vmatprep.subr.mxu0 %v451
        %885 = vmatpush1.msra.mxu0 %v450
        %886 = vmatprep.subr.mxu0 %v455
        %887 = vmatpush1.msra.mxu0 %v454
        %888 = vmatprep.subr.mxu0 %v459
        %889 = vmatpush1.msra.mxu0 %v458
        %890 = vmatprep.subr.mxu0 %v463
        %891 = vmatpush1.msra.mxu0 %v462
        %892 = vmatprep.subr.mxu0 %v467
        %893 = vmatpush1.msra.mxu0 %v466
        %894 = vmatprep.subr.mxu0 %v471
        %895 = vmatpush1.msra.mxu0 %v470
        %896 = vmatprep.subr.mxu0 %v475
        %897 = vmatpush1.msra.mxu0 %v474
        %898 = vmatprep.subr.mxu0 %v479
        %899 = vmatpush1.msra.mxu0 %v478
        %900 = vmatprep.subr.mxu0 %v483
        %901 = vmatpush1.msra.mxu0 %v482
        %902 = vmatprep.mubr.f32.mxu0 %v325
        %903 = vmatmul.mubr.f32.gmra.mrb[0].mxu0 %v324
        %v904 = vpop.f32.mrb[0].mxu0
        %v905 = vadd.f32 0.0, %v904
        %v906 = vpop.f32.mrb[0].mxu0
        %v907 = vadd.f32 0.0, %v906
        %908 = vmatprep.mubr.f32.mxu0 %v329
        %909 = vmatmul.mubr.f32.gmra.mrb[0].mxu0 %v328
        %v910 = vpop.f32.mrb[0].mxu0
        %v911 = vadd.f32 0.0, %v910
        %v912 = vpop.f32.mrb[0].mxu0
        %v913 = vadd.f32 0.0, %v912
        %914 = vmatprep.mubr.f32.mxu0 %v333
        %915 = vmatmul.mubr.f32.gmra.mrb[0].mxu0 %v332
        %v916 = vpop.f32.mrb[0].mxu0
        %v917 = vadd.f32 0.0, %v916
        %v918 = vpop.f32.mrb[0].mxu0
        %v919 = vadd.f32 0.0, %v918
        %920 = vmatprep.mubr.f32.mxu0 %v337
        %921 = vmatmul.mubr.f32.gmra.mrb[0].mxu0 %v336
        %v922 = vpop.f32.mrb[0].mxu0
        %v923 = vadd.f32 0.0, %v922
        %v924 = vpop.f32.mrb[0].mxu0
        %v925 = vadd.f32 0.0, %v924
        %926 = vmatprep.mubr.f32.mxu0 %v341
        %927 = vmatmul.mubr.f32.gmra.mrb[0].mxu0 %v340
        %v928 = vpop.f32.mrb[0].mxu0
        %v929 = vadd.f32 0.0, %v928
        %v930 = vpop.f32.mrb[0].mxu0
        %v931 = vadd.f32 0.0, %v930
        %932 = vmatprep.mubr.f32.mxu0 %v345
        %933 = vmatmul.mubr.f32.gmra.mrb[0].mxu0 %v344
        %v934 = vpop.f32.mrb[0].mxu0
        %v935 = vadd.f32 0.0, %v934
        %v936 = vpop.f32.mrb[0].mxu0
        %v937 = vadd.f32 0.0, %v936
        %938 = vmatprep.mubr.f32.mxu0 %v349
        %939 = vmatmul.mubr.f32.gmra.mrb[0].mxu0 %v348
        %v940 = vpop.f32.mrb[0].mxu0
        %v941 = vadd.f32 0.0, %v940
        %v942 = vpop.f32.mrb[0].mxu0
        %v943 = vadd.f32 0.0, %v942
        %944 = vmatprep.mubr.f32.mxu0 %v353
        %945 = vmatmul.mubr.f32.gmra.mrb[0].mxu0 %v352
        %v946 = vpop.f32.mrb[0].mxu0
        %v947 = vadd.f32 0.0, %v946
        %v948 = vpop.f32.mrb[0].mxu0
        %v949 = vadd.f32 0.0, %v948
        %950 = vdwg.mxu0
        %951 = vmatprep.subr.mxu0 %v487
        %952 = vmatpush1.msra.mxu0 %v486
        %953 = vmatprep.subr.mxu0 %v491
        %954 = vmatpush1.msra.mxu0 %v490
        %955 = vmatprep.subr.mxu0 %v495
        %956 = vmatpush1.msra.mxu0 %v494
        %957 = vmatprep.subr.mxu0 %v499
        %958 = vmatpush1.msra.mxu0 %v498
        %959 = vmatprep.subr.mxu0 %v503
        %960 = vmatpush1.msra.mxu0 %v502
        %961 = vmatprep.subr.mxu0 %v507
        %962 = vmatpush1.msra.mxu0 %v506
        %963 = vmatprep.subr.mxu0 %v511
        %964 = vmatpush1.msra.mxu0 %v510
        %965 = vmatprep.subr.mxu0 %v515
        %966 = vmatpush1.msra.mxu0 %v514
        %967 = vmatprep.subr.mxu0 %v519
        %968 = vmatpush1.msra.mxu0 %v518
        %969 = vmatprep.subr.mxu0 %v523
        %970 = vmatpush1.msra.mxu0 %v522
        %971 = vmatprep.subr.mxu0 %v527
        %972 = vmatpush1.msra.mxu0 %v526
        %973 = vmatprep.subr.mxu0 %v531
        %974 = vmatpush1.msra.mxu0 %v530
        %975 = vmatprep.subr.mxu0 %v535
        %976 = vmatpush1.msra.mxu0 %v534
        %977 = vmatprep.subr.mxu0 %v539
        %978 = vmatpush1.msra.mxu0 %v538
        %979 = vmatprep.subr.mxu0 %v543
        %980 = vmatpush1.msra.mxu0 %v542
        %981 = vmatprep.subr.mxu0 %v547
        %982 = vmatpush1.msra.mxu0 %v546
        %983 = vmatprep.subr.mxu0 %v551
        %984 = vmatpush1.msra.mxu0 %v550
        %985 = vmatprep.subr.mxu0 %v555
        %986 = vmatpush1.msra.mxu0 %v554
        %987 = vmatprep.subr.mxu0 %v559
        %988 = vmatpush1.msra.mxu0 %v558
        %989 = vmatprep.subr.mxu0 %v563
        %990 = vmatpush1.msra.mxu0 %v562
        %991 = vmatprep.subr.mxu0 %v567
        %992 = vmatpush1.msra.mxu0 %v566
        %993 = vmatprep.subr.mxu0 %v571
        %994 = vmatpush1.msra.mxu0 %v570
        %995 = vmatprep.subr.mxu0 %v575
        %996 = vmatpush1.msra.mxu0 %v574
        %997 = vmatprep.subr.mxu0 %v579
        %998 = vmatpush1.msra.mxu0 %v578
        %999 = vmatprep.subr.mxu0 %v583
        %1000 = vmatpush1.msra.mxu0 %v582
        %1001 = vmatprep.subr.mxu0 %v587
        %1002 = vmatpush1.msra.mxu0 %v586
        %1003 = vmatprep.subr.mxu0 %v591
        %1004 = vmatpush1.msra.mxu0 %v590
        %1005 = vmatprep.subr.mxu0 %v595
        %1006 = vmatpush1.msra.mxu0 %v594
        %1007 = vmatprep.subr.mxu0 %v599
        %1008 = vmatpush1.msra.mxu0 %v598
        %1009 = vmatprep.subr.mxu0 %v603
        %1010 = vmatpush1.msra.mxu0 %v602
        %1011 = vmatprep.subr.mxu0 %v607
        %1012 = vmatpush1.msra.mxu0 %v606
        %1013 = vmatprep.subr.mxu0 %v611
        %1014 = vmatpush1.msra.mxu0 %v610
        %1015 = vmatprep.mubr.f32.mxu0 %v327
        %1016 = vmatmul.mubr.f32.gmra.mrb[0].mxu0 %v326
        %v1017 = vpop.f32.mrb[0].mxu0
        %v1018 = vadd.f32 %v905, %v1017
        %v1019 = vpop.f32.mrb[0].mxu0
        %v1020 = vadd.f32 %v907, %v1019
        %1021 = vmatprep.mubr.f32.mxu0 %v331
        %1022 = vmatmul.mubr.f32.gmra.mrb[0].mxu0 %v330
        %v1023 = vpop.f32.mrb[0].mxu0
        %v1024 = vadd.f32 %v911, %v1023
        %v1025 = vpop.f32.mrb[0].mxu0
        %v1026 = vadd.f32 %v913, %v1025
        %1027 = vmatprep.mubr.f32.mxu0 %v335
        %1028 = vmatmul.mubr.f32.gmra.mrb[0].mxu0 %v334
        %v1029 = vpop.f32.mrb[0].mxu0
        %v1030 = vadd.f32 %v917, %v1029
        %v1031 = vpop.f32.mrb[0].mxu0
        %v1032 = vadd.f32 %v919, %v1031
        %1033 = vmatprep.mubr.f32.mxu0 %v339
        %1034 = vmatmul.mubr.f32.gmra.mrb[0].mxu0 %v338
        %v1035 = vpop.f32.mrb[0].mxu0
        %v1036 = vadd.f32 %v923, %v1035
        %v1037 = vpop.f32.mrb[0].mxu0
        %v1038 = vadd.f32 %v925, %v1037
        %1039 = vmatprep.mubr.f32.mxu0 %v343
        %1040 = vmatmul.mubr.f32.gmra.mrb[0].mxu0 %v342
        %v1041 = vpop.f32.mrb[0].mxu0
        %v1042 = vadd.f32 %v929, %v1041
        %v1043 = vpop.f32.mrb[0].mxu0
        %v1044 = vadd.f32 %v931, %v1043
        %1045 = vmatprep.mubr.f32.mxu0 %v347
        %1046 = vmatmul.mubr.f32.gmra.mrb[0].mxu0 %v346
        %v1047 = vpop.f32.mrb[0].mxu0
        %v1048 = vadd.f32 %v935, %v1047
        %v1049 = vpop.f32.mrb[0].mxu0
        %v1050 = vadd.f32 %v937, %v1049
        %1051 = vmatprep.mubr.f32.mxu0 %v351
        %1052 = vmatmul.mubr.f32.gmra.mrb[0].mxu0 %v350
        %v1053 = vpop.f32.mrb[0].mxu0
        %v1054 = vadd.f32 %v941, %v1053
        %v1055 = vpop.f32.mrb[0].mxu0
        %v1056 = vadd.f32 %v943, %v1055
        %1057 = vmatprep.mubr.f32.mxu0 %v355
        %1058 = vmatmul.mubr.f32.gmra.mrb[0].mxu0 %v354
        %v1059 = vpop.f32.mrb[0].mxu0
        %v1060 = vadd.f32 %v947, %v1059
        %v1061 = vpop.f32.mrb[0].mxu0
        %v1062 = vadd.f32 %v949, %v1061
        %1063 = vdwg.mxu0
        %v1064 = vadd.f32 %v292, %v792
        %v1065 = vadd.f32 %v293, %v794
        %v1066 = vadd.f32 %v294, %v1018
        %v1067 = vadd.f32 %v295, %v1020
        %v1068 = vadd.f32 %v296, %v798
        %v1069 = vadd.f32 %v297, %v800
        %v1070 = vadd.f32 %v298, %v1024
        %v1071 = vadd.f32 %v299, %v1026
        %v1072 = vadd.f32 %v300, %v804
        %v1073 = vadd.f32 %v301, %v806
        %v1074 = vadd.f32 %v302, %v1030
        %v1075 = vadd.f32 %v303, %v1032
        %v1076 = vadd.f32 %v304, %v810
        %v1077 = vadd.f32 %v305, %v812
        %v1078 = vadd.f32 %v306, %v1036
        %v1079 = vadd.f32 %v307, %v1038
        %v1080 = vadd.f32 %v308, %v816
        %v1081 = vadd.f32 %v309, %v818
        %v1082 = vadd.f32 %v310, %v1042
        %v1083 = vadd.f32 %v311, %v1044
        %v1084 = vadd.f32 %v312, %v822
        %v1085 = vadd.f32 %v313, %v824
        %v1086 = vadd.f32 %v314, %v1048
        %v1087 = vadd.f32 %v315, %v1050
        %v1088 = vadd.f32 %v316, %v828
        %v1089 = vadd.f32 %v317, %v830
        %v1090 = vadd.f32 %v318, %v1054
        %v1091 = vadd.f32 %v319, %v1056
        %v1092 = vadd.f32 %v320, %v834
        %v1093 = vadd.f32 %v321, %v836
        %v1094 = vadd.f32 %v322, %v1060
        %v1095 = vadd.f32 %v323, %v1062
        %1096 = vst [vmem:[#allocation2] sm:$0xff] %v1064
        %1097 = vst [vmem:[#allocation2 + $0x8] sm:$0xff] %v1065
        %1098 = vst [vmem:[#allocation2 + $0x10] sm:$0xff] %v1066
        %1099 = vst [vmem:[#allocation2 + $0x18] sm:$0xff] %v1067
        %1100 = vst [vmem:[#allocation2 + $0x20] sm:$0xff] %v1068
        %1101 = vst [vmem:[#allocation2 + $0x28] sm:$0xff] %v1069
        %1102 = vst [vmem:[#allocation2 + $0x30] sm:$0xff] %v1070
        %1103 = vst [vmem:[#allocation2 + $0x38] sm:$0xff] %v1071
        %1104 = vst [vmem:[#allocation2 + $0x40] sm:$0xff] %v1072
        %1105 = vst [vmem:[#allocation2 + $0x48] sm:$0xff] %v1073
        %1106 = vst [vmem:[#allocation2 + $0x50] sm:$0xff] %v1074
        %1107 = vst [vmem:[#allocation2 + $0x58] sm:$0xff] %v1075
        %1108 = vst [vmem:[#allocation2 + $0x60] sm:$0xff] %v1076
        %1109 = vst [vmem:[#allocation2 + $0x68] sm:$0xff] %v1077
        %1110 = vst [vmem:[#allocation2 + $0x70] sm:$0xff] %v1078
        %1111 = vst [vmem:[#allocation2 + $0x78] sm:$0xff] %v1079
        %1112 = vst [vmem:[#allocation2 + $0x80] sm:$0xff] %v1080
        %1113 = vst [vmem:[#allocation2 + $0x88] sm:$0xff] %v1081
        %1114 = vst [vmem:[#allocation2 + $0x90] sm:$0xff] %v1082
        %1115 = vst [vmem:[#allocation2 + $0x98] sm:$0xff] %v1083
        %1116 = vst [vmem:[#allocation2 + $0xa0] sm:$0xff] %v1084
        %1117 = vst [vmem:[#allocation2 + $0xa8] sm:$0xff] %v1085
        %1118 = vst [vmem:[#allocation2 + $0xb0] sm:$0xff] %v1086
        %1119 = vst [vmem:[#allocation2 + $0xb8] sm:$0xff] %v1087
        %1120 = vst [vmem:[#allocation2 + $0xc0] sm:$0xff] %v1088
        %1121 = vst [vmem:[#allocation2 + $0xc8] sm:$0xff] %v1089
        %1122 = vst [vmem:[#allocation2 + $0xd0] sm:$0xff] %v1090
        %1123 = vst [vmem:[#allocation2 + $0xd8] sm:$0xff] %v1091
        %1124 = vst [vmem:[#allocation2 + $0xe0] sm:$0xff] %v1092
        %1125 = vst [vmem:[#allocation2 + $0xe8] sm:$0xff] %v1093
        %1126 = vst [vmem:[#allocation2 + $0xf0] sm:$0xff] %v1094
        %1127 = vst [vmem:[#allocation2 + $0xf8] sm:$0xff] %v1095
        %p1128 = scmp.eq.s32.totalorder %s26, 8
        // Predicated region
        $region49: #{tpu_custom_call.1} parent=31 // pred_check
          %p1129 = pneg %p1128
        $region50: #{tpu_custom_call.1} parent=31 // pred_check_branch
          %1131 = sbr.rel (%p1129) target = $region52
        $region51: #{tpu_custom_call.1} parent=31 // pred_region
          %v1132 = vld [vmem:[#allocation2] sm:$0xff]
          %v1133 = vld [vmem:[#allocation2 + $0x8] sm:$0xff]
          %v1134 = vld [vmem:[#allocation2 + $0x10] sm:$0xff]
          %v1135 = vld [vmem:[#allocation2 + $0x18] sm:$0xff]
          %v1136 = vld [vmem:[#allocation2 + $0x20] sm:$0xff]
          %v1137 = vld [vmem:[#allocation2 + $0x28] sm:$0xff]
          %v1138 = vld [vmem:[#allocation2 + $0x30] sm:$0xff]
          %v1139 = vld [vmem:[#allocation2 + $0x38] sm:$0xff]
          %v1140 = vld [vmem:[#allocation2 + $0x40] sm:$0xff]
          %v1141 = vld [vmem:[#allocation2 + $0x48] sm:$0xff]
          %v1142 = vld [vmem:[#allocation2 + $0x50] sm:$0xff]
          %v1143 = vld [vmem:[#allocation2 + $0x58] sm:$0xff]
          %v1144 = vld [vmem:[#allocation2 + $0x60] sm:$0xff]
          %v1145 = vld [vmem:[#allocation2 + $0x68] sm:$0xff]
          %v1146 = vld [vmem:[#allocation2 + $0x70] sm:$0xff]
          %v1147 = vld [vmem:[#allocation2 + $0x78] sm:$0xff]
          %v1148 = vld [vmem:[#allocation2 + $0x80] sm:$0xff]
          %v1149 = vld [vmem:[#allocation2 + $0x88] sm:$0xff]
          %v1150 = vld [vmem:[#allocation2 + $0x90] sm:$0xff]
          %v1151 = vld [vmem:[#allocation2 + $0x98] sm:$0xff]
          %v1152 = vld [vmem:[#allocation2 + $0xa0] sm:$0xff]
          %v1153 = vld [vmem:[#allocation2 + $0xa8] sm:$0xff]
          %v1154 = vld [vmem:[#allocation2 + $0xb0] sm:$0xff]
          %v1155 = vld [vmem:[#allocation2 + $0xb8] sm:$0xff]
          %v1156 = vld [vmem:[#allocation2 + $0xc0] sm:$0xff]
          %v1157 = vld [vmem:[#allocation2 + $0xc8] sm:$0xff]
          %v1158 = vld [vmem:[#allocation2 + $0xd0] sm:$0xff]
          %v1159 = vld [vmem:[#allocation2 + $0xd8] sm:$0xff]
          %v1160 = vld [vmem:[#allocation2 + $0xe0] sm:$0xff]
          %v1161 = vld [vmem:[#allocation2 + $0xe8] sm:$0xff]
          %v1162 = vld [vmem:[#allocation2 + $0xf0] sm:$0xff]
          %v1163 = vld [vmem:[#allocation2 + $0xf8] sm:$0xff]
          %v1164 = vld [vmem:[#allocation8] sm:$0xf]
          %v1166 = vlaneseq
          %v1167 = vshrl.u32 %v1166, 7
          %v1168 = vsub.s32 0, %v1167
          %v1169 = vrot.slane %v1164, %v1168
          %v1170 = vlaneseq
          %v1171 = vshrl.u32 %v1170, 7
          %v1172 = vsub.s32 1, %v1171
          %v1173 = vrot.slane %v1164, %v1172
          %v1174 = vlaneseq
          %v1175 = vshrl.u32 %v1174, 7
          %v1176 = vsub.s32 2, %v1175
          %v1177 = vrot.slane %v1164, %v1176
          %v1178 = vlaneseq
          %v1179 = vshrl.u32 %v1178, 7
          %v1180 = vsub.s32 3, %v1179
          %v1181 = vrot.slane %v1164, %v1180
          %v1186 = vadd.f32 %v1132, %v1169
          %v1187 = vadd.f32 %v1133, %v1173
          %v1188 = vadd.f32 %v1134, %v1177
          %v1189 = vadd.f32 %v1135, %v1181
          %v1190 = vadd.f32 %v1136, %v1169
          %v1191 = vadd.f32 %v1137, %v1173
          %v1192 = vadd.f32 %v1138, %v1177
          %v1193 = vadd.f32 %v1139, %v1181
          %v1194 = vadd.f32 %v1140, %v1169
          %v1195 = vadd.f32 %v1141, %v1173
          %v1196 = vadd.f32 %v1142, %v1177
          %v1197 = vadd.f32 %v1143, %v1181
          %v1198 = vadd.f32 %v1144, %v1169
          %v1199 = vadd.f32 %v1145, %v1173
          %v1200 = vadd.f32 %v1146, %v1177
          %v1201 = vadd.f32 %v1147, %v1181
          %v1202 = vadd.f32 %v1148, %v1169
          %v1203 = vadd.f32 %v1149, %v1173
          %v1204 = vadd.f32 %v1150, %v1177
          %v1205 = vadd.f32 %v1151, %v1181
          %v1206 = vadd.f32 %v1152, %v1169
          %v1207 = vadd.f32 %v1153, %v1173
          %v1208 = vadd.f32 %v1154, %v1177
          %v1209 = vadd.f32 %v1155, %v1181
          %v1210 = vadd.f32 %v1156, %v1169
          %v1211 = vadd.f32 %v1157, %v1173
          %v1212 = vadd.f32 %v1158, %v1177
          %v1213 = vadd.f32 %v1159, %v1181
          %v1214 = vadd.f32 %v1160, %v1169
          %v1215 = vadd.f32 %v1161, %v1173
          %v1216 = vadd.f32 %v1162, %v1177
          %v1217 = vadd.f32 %v1163, %v1181
          %1218 = vst [vmem:[#allocation9] sm:$0xff] %v1186
          %1219 = vst [vmem:[#allocation9 + $0x8] sm:$0xff] %v1187
          %1220 = vst [vmem:[#allocation9 + $0x10] sm:$0xff] %v1188
          %1221 = vst [vmem:[#allocation9 + $0x18] sm:$0xff] %v1189
          %1222 = vst [vmem:[#allocation9 + $0x20] sm:$0xff] %v1190
          %1223 = vst [vmem:[#allocation9 + $0x28] sm:$0xff] %v1191
          %1224 = vst [vmem:[#allocation9 + $0x30] sm:$0xff] %v1192
          %1225 = vst [vmem:[#allocation9 + $0x38] sm:$0xff] %v1193
          %1226 = vst [vmem:[#allocation9 + $0x40] sm:$0xff] %v1194
          %1227 = vst [vmem:[#allocation9 + $0x48] sm:$0xff] %v1195
          %1228 = vst [vmem:[#allocation9 + $0x50] sm:$0xff] %v1196
          %1229 = vst [vmem:[#allocation9 + $0x58] sm:$0xff] %v1197
          %1230 = vst [vmem:[#allocation9 + $0x60] sm:$0xff] %v1198
          %1231 = vst [vmem:[#allocation9 + $0x68] sm:$0xff] %v1199
          %1232 = vst [vmem:[#allocation9 + $0x70] sm:$0xff] %v1200
          %1233 = vst [vmem:[#allocation9 + $0x78] sm:$0xff] %v1201
          %1234 = vst [vmem:[#allocation9 + $0x80] sm:$0xff] %v1202
          %1235 = vst [vmem:[#allocation9 + $0x88] sm:$0xff] %v1203
          %1236 = vst [vmem:[#allocation9 + $0x90] sm:$0xff] %v1204
          %1237 = vst [vmem:[#allocation9 + $0x98] sm:$0xff] %v1205
          %1238 = vst [vmem:[#allocation9 + $0xa0] sm:$0xff] %v1206
          %1239 = vst [vmem:[#allocation9 + $0xa8] sm:$0xff] %v1207
          %1240 = vst [vmem:[#allocation9 + $0xb0] sm:$0xff] %v1208
          %1241 = vst [vmem:[#allocation9 + $0xb8] sm:$0xff] %v1209
          %1242 = vst [vmem:[#allocation9 + $0xc0] sm:$0xff] %v1210
          %1243 = vst [vmem:[#allocation9 + $0xc8] sm:$0xff] %v1211
          %1244 = vst [vmem:[#allocation9 + $0xd0] sm:$0xff] %v1212
          %1245 = vst [vmem:[#allocation9 + $0xd8] sm:$0xff] %v1213
          %1246 = vst [vmem:[#allocation9 + $0xe0] sm:$0xff] %v1214
          %1247 = vst [vmem:[#allocation9 + $0xe8] sm:$0xff] %v1215
          %1248 = vst [vmem:[#allocation9 + $0xf0] sm:$0xff] %v1216
          %1249 = vst [vmem:[#allocation9 + $0xf8] sm:$0xff] %v1217
        $region52: #{tpu_custom_call.1} parent=31 // pred_fallthru
          _
        // Predicated region
        $region53: #{tpu_custom_call.1} parent=31 // pred_check
          %p1250 = pneg %p126
        $region54: #{tpu_custom_call.1} parent=31 // pred_check_branch
          %1252 = sbr.rel (%p1250) target = $region56
        $region55: #{tpu_custom_call.1} parent=31 // pred_region
          %s1253 = smul.u32 8, %s25
          %s1255 = ssub.s32 4096, 4096
          %1256 = vsyncadd [#allocation5], %s1255
          %s1257 = smul.addr %s1253, 4
          %s1258 = smul.addr %s1257, 128
          %s1259 = scalar_lea.hbm %s3, %s1258
          %s1260 = sshll.u32 [#allocation9], 4
          %s1261 = int_to_ptr.vmem [resolvable:$true] %s1260
          %1266 = dma.vmem_to_hbm [thread:$0]  %s1261, 4096, %s1259, [#allocation5], 512, 512, 32
        $region56: #{tpu_custom_call.1} parent=31 // pred_fallthru
          _
        // Predicated region
        $region57: #{tpu_custom_call.1} parent=31 // pred_check
          %p1267 = pneg %p126
        $region58: #{tpu_custom_call.1} parent=31 // pred_check_branch
          %1269 = sbr.rel (%p1267) target = $region60
        $region59: #{tpu_custom_call.1} parent=31 // pred_region
          %1270 = dma.done [#allocation5], 4096
        $region60: #{tpu_custom_call.1} parent=31 // pred_fallthru
          _
      $region32: #{tpu_custom_call.1} parent=5 // pred_fallthru
        _
      %p1271 = scmp.le.s32.totalorder 2, %s16
      // Predicated region
      $region61: #{tpu_custom_call.1} parent=5 // pred_check
        %p1272 = pneg %p1271
      $region62: #{tpu_custom_call.1} parent=5 // pred_check_branch
        %1274 = sbr.rel (%p1272) target = $region64
      $region63: #{tpu_custom_call.1} parent=5 // pred_region
        %s1275 = ssub.s32 %s16, 2
      $region64: #{tpu_custom_call.1} parent=5 // pred_fallthru
        _
    $region6: #{tpu_custom_call.1} parent=1 // loop_footer
      %s20 = sadd.s32 1, %s16
    $region7: #{tpu_custom_call.1} parent=1 // loop_footer_branch
      %15 = sbr.rel target = $region3
    $region8: #{tpu_custom_call.1} parent=1 // loop_exit
      _
    %1276 = vsyncpa [#allocation4], 1
    %s1277 = scalar_lea.sflag [#allocation4], 1
    %1278 = vsyncpa %s1277, 1
    %1279 = vsyncpa [#allocation7], 1
    %s1280 = scalar_lea.sflag [#allocation7], 1
    %1281 = vsyncpa %s1280, 1
    %1282 = vsyncpa [#allocation5], 1
    %s1283 = scalar_lea.sflag [#allocation5], 1
    %1284 = vsyncpa %s1283, 1

</llo_original>
